<compile_context>
chip_gen: v5e
topology: v5e:2x2
jax: 0.10.0
libtpu: 0.0.40
codegen_flags: <defaults>
</compile_context>

<pallas_src>
import numpy as np
import jax
import jax.numpy as jnp
from jax.experimental import pallas as pl
from jax.experimental.pallas import tpu as pltpu

# ---- synthetic "args" ------------------------------------------------------
N_ENTITIES     = 8    # number of entities
ENTITY_SHAPE   = 16   # de
ATTN_EMBED_DIM = 32   # dh
RNN_HIDDEN_DIM = 32   # od
N_ACTIONS      = 8    # na (actions)
N_AGENTS       = 4
N_HEADS        = 4
HEAD_DIM       = ATTN_EMBED_DIM // N_HEADS


def _round_up(x, m):
    return ((x + m - 1) // m) * m


# ---- Pallas kernel ---------------------------------------------------------
def recognition_kernel(ent_act_ref, aux_ref,
                       w_emb_ref, b_emb_ref, w_in_ref,
                       w_out_ref, b_out_ref,
                       w_h1_ref, b_h1_ref, w_h2_ref, b_h2_ref,
                       out_ref):
    f32 = jnp.float32
    T, ne, din = ent_act_ref.shape
    na = aux_ref.shape[1]
    dh = w_in_ref.shape[0]
    nh, hd = N_HEADS, HEAD_DIM
    od = out_ref.shape[1] // 2

    # ---- fused entity + action embedding: relu([ent|act] @ [w_ent; w_act] + b)
    xin = ent_act_ref[...].reshape(T * ne, din)
    x = jnp.dot(xin, w_emb_ref[...], preferred_element_type=f32) + b_emb_ref[...]
    x = jnp.maximum(x, 0.0)                                   # (T*ne, dh)

    # ---- qkv projection (1/sqrt(hd) already folded into the q columns of w_in)
    qkv = jnp.dot(x, w_in_ref[...], preferred_element_type=f32)
    qkv = qkv.reshape(T, ne, 3 * dh)
    q = qkv[:, :na, 0:dh]                                     # (T, na, dh)
    k = qkv[:, :, dh:2 * dh]                                  # (T, ne, dh)
    v = qkv[:, :, 2 * dh:3 * dh]                              # (T, ne, dh)

    # ---- precomputed mask data (packed into one small aux tensor) ----
    aux = aux_ref[...]                                        # (T, na, ne+2)
    neg_bias = aux[:, :, 0:ne]                                # -1e30 where not visible
    valid = aux[:, :, ne:ne + 1]                              # 1.0 if any entity visible
    keep = aux[:, :, ne + 1:ne + 2]                           # 1.0 if agent active

    # ---- multi-head attention, batched over the whole tile ----
    head_outs = []
    for h in range(nh):
        sl = slice(h * hd, (h + 1) * hd)
        logits = jnp.einsum('bqd,bkd->bqk', q[:, :, sl], k[:, :, sl],
                            preferred_element_type=f32) + neg_bias   # (T, na, ne)
        m = jnp.max(logits, axis=-1, keepdims=True)
        e = jnp.exp(logits - m)                                # masked entries -> exactly 0
        den = jnp.sum(e, axis=-1, keepdims=True)               # always >= 1
        w = e * pl.reciprocal(den, approx=True)
        head_outs.append(jnp.einsum('bqk,bkd->bqd', w, v[:, :, sl],
                                    preferred_element_type=f32))
    attn = jnp.concatenate(head_outs, axis=-1)                 # (T, na, dh)
    # rows with no visible entity -> zero attention output (torch NaN -> 0 path)
    attn = attn * valid

    attn2 = jnp.dot(attn.reshape(T * na, dh), w_out_ref[...],
                    preferred_element_type=f32) + b_out_ref[...]
    # post-mask (inactive agents) + relu
    hidden = jnp.maximum(attn2, 0.0) * keep.reshape(T * na, 1)  # (T*na, dh)

    # ---- fused mean/logvar heads: layer1 = [w_m1|w_v1], layer2 = blockdiag ----
    h1 = jnp.maximum(jnp.dot(hidden, w_h1_ref[...], preferred_element_type=f32)
                     + b_h1_ref[...], 0.0)                    # (T*na, 2*dh)
    out2 = jnp.dot(h1, w_h2_ref[...], preferred_element_type=f32) + b_h2_ref[...]

    # clamp(-10, 0) applied only to the logvar half of the columns
    col = jax.lax.broadcasted_iota(jnp.int32, (1, 2 * od), 1)
    out_ref[...] = jnp.where(col >= od, jnp.clip(out2, -10.0, 0.0), out2)


# ---- wrapper ---------------------------------------------------------------
def recognition_pallas(batch, p, tile_b=128):
    entities = jnp.asarray(batch['entities'], jnp.float32)
    entity_mask = jnp.asarray(batch['entity_mask'], jnp.float32)
    obs_mask = jnp.asarray(batch['obs_mask'], jnp.float32)
    actions = jnp.asarray(batch['actions_onehot'], jnp.float32)

    restore_ts = entities.ndim == 4
    if restore_ts:
        bs, ts = entities.shape[:2]
        entities = entities.reshape((bs * ts,) + entities.shape[2:])
        entity_mask = entity_mask.reshape((bs * ts,) + entity_mask.shape[2:])
        obs_mask = obs_mask.reshape((bs * ts,) + obs_mask.shape[2:])
        actions = actions.reshape((bs * ts,) + actions.shape[2:])

    B, ne, de = entities.shape
    na, nact = actions.shape[1], actions.shape[2]
    dh, od, hd = ATTN_EMBED_DIM, RNN_HIDDEN_DIM, HEAD_DIM

    # fold the action zero-padding + entity/action concat out of the kernel
    act_pad = jnp.zeros((B, ne, nact), jnp.float32).at[:, :na, :].set(actions)
    ent_act = jnp.concatenate([entities, act_pad], axis=-1)            # (B, ne, de+nact)

    # pack all per-(batch, agent) mask data into one small aux input
    pm = obs_mask[:, :na, :]                                            # 1.0 = not visible
    neg_bias = jnp.where(pm > 0.5, jnp.float32(-1e30), jnp.float32(0.0))
    valid = (jnp.min(pm, axis=-1, keepdims=True) < 0.5).astype(jnp.float32)
    keep = 1.0 - entity_mask[:, :na, None]                              # 1.0 = active agent
    aux = jnp.concatenate([neg_bias, valid, keep], axis=-1)             # (B, na, ne+2)

    # fused / pre-scaled weights
    w_emb = jnp.concatenate([p['w_ent'], p['w_act']], axis=0)           # (de+nact, dh)
    b_emb = p['b_ent']
    qscale = jnp.concatenate([jnp.full((1, dh), 1.0 / np.sqrt(hd), jnp.float32),
                              jnp.ones((1, 2 * dh), jnp.float32)], axis=-1)
    w_in = p['w_in'] * qscale                                           # q columns pre-scaled
    w_out, b_out = p['w_out'], p['b_out']
    w_h1 = jnp.concatenate([p['w_m1'], p['w_v1']], axis=1)              # (dh, 2dh)
    b_h1 = jnp.concatenate([p['b_m1'], p['b_v1']], axis=1)              # (1, 2dh)
    zpad = jnp.zeros((dh, od), jnp.float32)
    w_h2 = jnp.concatenate(
        [jnp.concatenate([p['w_m2'], zpad], axis=1),
         jnp.concatenate([zpad, p['w_v2']], axis=1)], axis=0)           # (2dh, 2od) blockdiag
    b_h2 = jnp.concatenate([p['b_m2'], p['b_v2']], axis=1)              # (1, 2od)

    # batch tiling: TILE_B elements per grid step, batch folded into matmul M
    tile_b = int(tile_b)
    if B < tile_b:
        tile_b = _round_up(B, 8)
    b_pad = _round_up(B, tile_b)
    if b_pad != B:
        pad = b_pad - B
        ent_act = jnp.pad(ent_act, ((0, pad), (0, 0), (0, 0)))
        aux = jnp.pad(aux, ((0, pad), (0, 0), (0, 0)))
    grid = (b_pad // tile_b,)

    def rep(a):
        nd = a.ndim
        return pl.BlockSpec(a.shape, lambda i, _n=nd: (0,) * _n)

    in_specs = [
        pl.BlockSpec((tile_b, ne, de + nact), lambda i: (i, 0, 0)),
        pl.BlockSpec((tile_b, na, ne + 2), lambda i: (i, 0, 0)),
        rep(w_emb), rep(b_emb), rep(w_in), rep(w_out), rep(b_out),
        rep(w_h1), rep(b_h1), rep(w_h2), rep(b_h2),
    ]
    out_specs = pl.BlockSpec((tile_b * na, 2 * od), lambda i: (i, 0))
    out_shape = jax.ShapeDtypeStruct((b_pad * na, 2 * od), jnp.float32)

    out = pl.pallas_call(
        recognition_kernel,
        out_shape=out_shape,
        grid_spec=pltpu.PrefetchScalarGridSpec(
            num_scalar_prefetch=0, grid=grid,
            in_specs=in_specs, out_specs=out_specs),
        compiler_params=pltpu.CompilerParams(
            dimension_semantics=("parallel",),
            vmem_limit_bytes=48 * 1024 * 1024),
    )(ent_act, aux, w_emb, b_emb, w_in, w_out, b_out, w_h1, b_h1, w_h2, b_h2)

    out = out.reshape(b_pad, na, 2 * od)[:B]
    mean = out[..., :od]
    logvar = out[..., od:]
    if restore_ts:
        mean = mean.reshape(bs, ts, na, od)
        logvar = logvar.reshape(bs, ts, na, od)
    return mean, logvar


# ---- pure-JAX reference (mirrors the PyTorch forward) ----------------------
def recognition_reference(batch, p):
    entities = jnp.asarray(batch['entities'], jnp.float32)
    entity_mask = jnp.asarray(batch['entity_mask'], jnp.float32)
    obs_mask = jnp.asarray(batch['obs_mask'], jnp.float32)
    actions = jnp.asarray(batch['actions_onehot'], jnp.float32)
    restore_ts = entities.ndim == 4
    if restore_ts:
        bs, ts = entities.shape[:2]
        entities = entities.reshape((bs * ts,) + entities.shape[2:])
        entity_mask = entity_mask.reshape((bs * ts,) + entity_mask.shape[2:])
        obs_mask = obs_mask.reshape((bs * ts,) + obs_mask.shape[2:])
        actions = actions.reshape((bs * ts,) + actions.shape[2:])

    B = entities.shape[0]
    dh, na, ne, nh, hd = ATTN_EMBED_DIM, N_AGENTS, N_ENTITIES, N_HEADS, HEAD_DIM

    he = entities @ p['w_ent'] + p['b_ent'][0]
    ha = actions @ p['w_act']
    ha_pad = jnp.zeros_like(he).at[:, :na].set(ha)
    x = jax.nn.relu(he + ha_pad)

    qkv = x @ p['w_in']
    q = qkv[:, :na, :dh].reshape(B, na, nh, hd)
    k = qkv[:, :, dh:2 * dh].reshape(B, ne, nh, hd)
    v = qkv[:, :, 2 * dh:].reshape(B, ne, nh, hd)
    logits = jnp.einsum('bqhd,bkhd->bhqk', q, k) / jnp.sqrt(jnp.float32(hd))
    pm = (obs_mask[:, :na, :] > 0.5)[:, None]
    logits = jnp.where(pm, -1e30, logits)
    m = jnp.max(logits, axis=-1, keepdims=True)
    e = jnp.where(pm, 0.0, jnp.exp(logits - m))
    den = jnp.sum(e, axis=-1, keepdims=True)
    w = e / jnp.where(den == 0.0, 1.0, den)
    attn = jnp.einsum('bhqk,bkhd->bqhd', w, v).reshape(B, na, dh)
    attn = attn @ p['w_out'] + p['b_out'][0]
    attn = jnp.where((entity_mask[:, :na] > 0.5)[..., None], 0.0, attn)
    hidden = jax.nn.relu(attn)

    mean = jax.nn.relu(hidden @ p['w_m1'] + p['b_m1'][0]) @ p['w_m2'] + p['b_m2'][0]
    logvar = jnp.clip(jax.nn.relu(hidden @ p['w_v1'] + p['b_v1'][0]) @ p['w_v2'] + p['b_v2'][0],
                      -10.0, 0.0)
    if restore_ts:
        mean = mean.reshape(bs, ts, na, -1)
        logvar = logvar.reshape(bs, ts, na, -1)
    return mean, logvar


# ---- deterministic parameter init ------------------------------------------
def init_params(key):
    ks = jax.random.split(key, 14)
    dh, de, od, nact = ATTN_EMBED_DIM, ENTITY_SHAPE, RNN_HIDDEN_DIM, N_ACTIONS
    def w(k, shape, scale): return jax.random.normal(k, shape, jnp.float32) * scale
    return {
        'w_act': w(ks[0], (nact, dh), 0.2),
        'w_ent': w(ks[1], (de, dh), 0.2),   'b_ent': w(ks[2], (1, dh), 0.1),
        'w_in':  w(ks[3], (dh, 3 * dh), 0.2),
        'w_out': w(ks[4], (dh, dh), 0.2),   'b_out': w(ks[5], (1, dh), 0.1),
        'w_m1':  w(ks[6], (dh, dh), 0.2),   'b_m1':  w(ks[7], (1, dh), 0.1),
        'w_m2':  w(ks[8], (dh, od), 0.2),   'b_m2':  w(ks[9], (1, od), 0.1),
        'w_v1':  w(ks[10], (dh, dh), 0.2),  'b_v1':  w(ks[11], (1, dh), 0.1),
        'w_v2':  w(ks[12], (dh, od), 0.2),  'b_v2':  w(ks[13], (1, od), 0.1) - 0.5,
    }


if __name__ == "__main__":
    key = jax.random.PRNGKey(0)
    params = init_params(jax.random.fold_in(key, 42))

    def make_batch(bs, ts, k1, k2, k3, k4):
        entities = jax.random.normal(k1, (bs, ts, N_ENTITIES, ENTITY_SHAPE), jnp.float32)
        act_ids = jax.random.randint(k2, (bs, ts, N_AGENTS), 0, N_ACTIONS)
        actions_onehot = jax.nn.one_hot(act_ids, N_ACTIONS, dtype=jnp.float32)
        obs_mask = (jax.random.uniform(k3, (bs, ts, N_ENTITIES, N_ENTITIES)) > 0.7
                    ).astype(jnp.float32)
        obs_mask = obs_mask.at[0, 0, 1, :].set(1.0)   # one fully-masked agent row (NaN path)
        entity_mask = (jax.random.uniform(k4, (bs, ts, N_ENTITIES)) > 0.8).astype(jnp.float32)
        return {'entities': entities, 'entity_mask': entity_mask,
                'obs_mask': obs_mask, 'actions_onehot': actions_onehot}

    # small case (single grid step) and a larger case (batch padding + 2 grid steps)
    for (bs, ts) in [(2, 2), (4, 40)]:
        ks = jax.random.split(jax.random.fold_in(key, bs * 1000 + ts), 4)
        batch = make_batch(bs, ts, *ks)

        mean, logvar = recognition_pallas(batch, params)
        jax.block_until_ready((mean, logvar))

        ref_mean, ref_logvar = recognition_reference(batch, params)
        np.testing.assert_allclose(np.asarray(mean), np.asarray(ref_mean),
                                   rtol=1e-2, atol=1e-2)
        np.testing.assert_allclose(np.asarray(logvar), np.asarray(ref_logvar),
                                   rtol=1e-2, atol=1e-2)
        assert mean.shape == (bs, ts, N_AGENTS, RNN_HIDDEN_DIM)
        assert logvar.shape == (bs, ts, N_AGENTS, RNN_HIDDEN_DIM)

    print("KERNEL_OK")
</pallas_src>

<mosaic_0001>
module attributes {stable_mosaic.version = 11 : i64} {
  func.func @recognition_kernel(%arg0: i32, %arg1: memref<8x8x24xf32, #tpu.memory_space<vmem>>, %arg2: memref<8x4x10xf32, #tpu.memory_space<vmem>>, %arg3: memref<24x32xf32, #tpu.memory_space<vmem>>, %arg4: memref<1x32xf32, #tpu.memory_space<vmem>>, %arg5: memref<32x96xf32, #tpu.memory_space<vmem>>, %arg6: memref<32x32xf32, #tpu.memory_space<vmem>>, %arg7: memref<1x32xf32, #tpu.memory_space<vmem>>, %arg8: memref<32x64xf32, #tpu.memory_space<vmem>>, %arg9: memref<1x64xf32, #tpu.memory_space<vmem>>, %arg10: memref<64x64xf32, #tpu.memory_space<vmem>>, %arg11: memref<1x64xf32, #tpu.memory_space<vmem>>, %arg12: memref<32x64xf32, #tpu.memory_space<vmem>>) attributes {dimension_semantics = [#tpu.dimension_semantics<parallel>], iteration_bounds = array<i64: 1>, scalar_prefetch = 0 : i64, scratch_operands = 0 : i64, tpu.core_type = #tpu.core_type<tc>, window_params = [{transform_indices = @transform_0, window_bounds = array<i64: 8, 8, 24>}, {transform_indices = @transform_1, window_bounds = array<i64: 8, 4, 10>}, {pipeline_mode = #tpu.pipeline_mode<synchronous>, transform_indices = @transform_2, window_bounds = array<i64: 24, 32>}, {pipeline_mode = #tpu.pipeline_mode<synchronous>, transform_indices = @transform_3, window_bounds = array<i64: 1, 32>}, {pipeline_mode = #tpu.pipeline_mode<synchronous>, transform_indices = @transform_4, window_bounds = array<i64: 32, 96>}, {pipeline_mode = #tpu.pipeline_mode<synchronous>, transform_indices = @transform_5, window_bounds = array<i64: 32, 32>}, {pipeline_mode = #tpu.pipeline_mode<synchronous>, transform_indices = @transform_6, window_bounds = array<i64: 1, 32>}, {pipeline_mode = #tpu.pipeline_mode<synchronous>, transform_indices = @transform_7, window_bounds = array<i64: 32, 64>}, {pipeline_mode = #tpu.pipeline_mode<synchronous>, transform_indices = @transform_8, window_bounds = array<i64: 1, 64>}, {pipeline_mode = #tpu.pipeline_mode<synchronous>, transform_indices = @transform_9, window_bounds = array<i64: 64, 64>}, {pipeline_mode = #tpu.pipeline_mode<synchronous>, transform_indices = @transform_10, window_bounds = array<i64: 1, 64>}, {transform_indices = @transform_11, window_bounds = array<i64: 32, 64>}]} {
    %c0 = arith.constant 0 : index
    %c0_0 = arith.constant 0 : index
    %c0_1 = arith.constant 0 : index
    %0 = vector.load %arg1[%c0, %c0_0, %c0_1] : memref<8x8x24xf32, #tpu.memory_space<vmem>>, vector<8x8x24xf32>
    %1 = vector.shape_cast %0 : vector<8x8x24xf32> to vector<64x24xf32>
    %c0_2 = arith.constant 0 : index
    %c0_3 = arith.constant 0 : index
    %2 = vector.load %arg3[%c0_2, %c0_3] : memref<24x32xf32, #tpu.memory_space<vmem>>, vector<24x32xf32>
    %cst = arith.constant dense<0.000000e+00> : vector<64x32xf32>
    %3 = tpu.matmul %1, %2, %cst {dimension_numbers = #tpu.dot_dimension_numbers<[1], [0], [0], [1], [0, 0, 1, 1], [], []>} : vector<64x24xf32>, vector<24x32xf32>, vector<64x32xf32> -> vector<64x32xf32>
    %c0_4 = arith.constant 0 : index
    %c0_5 = arith.constant 0 : index
    %4 = vector.load %arg4[%c0_4, %c0_5] : memref<1x32xf32, #tpu.memory_space<vmem>>, vector<1x32xf32>
    %5 = vector.broadcast %4 : vector<1x32xf32> to vector<64x32xf32>
    %6 = arith.addf %3, %5 : vector<64x32xf32>
    %cst_6 = arith.constant 0.000000e+00 : f32
    %7 = vector.broadcast %cst_6 : f32 to vector<64x32xf32>
    %8 = arith.maximumf %6, %7 : vector<64x32xf32>
    %c0_7 = arith.constant 0 : index
    %c0_8 = arith.constant 0 : index
    %9 = vector.load %arg5[%c0_7, %c0_8] : memref<32x96xf32, #tpu.memory_space<vmem>>, vector<32x96xf32>
    %cst_9 = arith.constant dense<0.000000e+00> : vector<64x96xf32>
    %10 = tpu.matmul %8, %9, %cst_9 {dimension_numbers = #tpu.dot_dimension_numbers<[1], [0], [0], [1], [0, 0, 1, 1], [], []>} : vector<64x32xf32>, vector<32x96xf32>, vector<64x96xf32> -> vector<64x96xf32>
    %11 = vector.shape_cast %10 : vector<64x96xf32> to vector<8x8x96xf32>
    %12 = vector.extract_strided_slice %11 {offsets = [0, 0, 0], sizes = [8, 4, 32], strides = [1, 1, 1]} : vector<8x8x96xf32> to vector<8x4x32xf32>
    %13 = vector.extract_strided_slice %11 {offsets = [0, 0, 32], sizes = [8, 8, 32], strides = [1, 1, 1]} : vector<8x8x96xf32> to vector<8x8x32xf32>
    %14 = vector.extract_strided_slice %11 {offsets = [0, 0, 64], sizes = [8, 8, 32], strides = [1, 1, 1]} : vector<8x8x96xf32> to vector<8x8x32xf32>
    %c0_10 = arith.constant 0 : index
    %c0_11 = arith.constant 0 : index
    %c0_12 = arith.constant 0 : index
    %15 = vector.load %arg2[%c0_10, %c0_11, %c0_12] : memref<8x4x10xf32, #tpu.memory_space<vmem>>, vector<8x4x10xf32>
    %16 = vector.extract_strided_slice %15 {offsets = [0, 0, 0], sizes = [8, 4, 8], strides = [1, 1, 1]} : vector<8x4x10xf32> to vector<8x4x8xf32>
    %17 = vector.extract_strided_slice %15 {offsets = [0, 0, 8], sizes = [8, 4, 1], strides = [1, 1, 1]} : vector<8x4x10xf32> to vector<8x4x1xf32>
    %18 = vector.extract_strided_slice %15 {offsets = [0, 0, 9], sizes = [8, 4, 1], strides = [1, 1, 1]} : vector<8x4x10xf32> to vector<8x4x1xf32>
    %19 = vector.extract_strided_slice %12 {offsets = [0, 0, 0], sizes = [8, 4, 8], strides = [1, 1, 1]} : vector<8x4x32xf32> to vector<8x4x8xf32>
    %20 = vector.extract_strided_slice %13 {offsets = [0, 0, 0], sizes = [8, 8, 8], strides = [1, 1, 1]} : vector<8x8x32xf32> to vector<8x8x8xf32>
    "tpu.trace_start"() <{level = 10 : i32, message = "bqd,bkd->bqk"}> : () -> ()
    %cst_13 = arith.constant dense<0.000000e+00> : vector<8x4x8xf32>
    %21 = tpu.matmul %19, %20, %cst_13 {dimension_numbers = #tpu.dot_dimension_numbers<[2], [2], [1], [1], [0, 0, 0, 1, 1, 1], [0], [0]>} : vector<8x4x8xf32>, vector<8x8x8xf32>, vector<8x4x8xf32> -> vector<8x4x8xf32>
    "tpu.trace_stop"() : () -> ()
    %22 = arith.addf %21, %16 : vector<8x4x8xf32>
    %cst_14 = arith.constant dense<0xFF800000> : vector<8x4xf32>
    %23 = vector.multi_reduction <maximumf>, %22, %cst_14 [2] : vector<8x4x8xf32> to vector<8x4xf32>
    %24 = vector.shape_cast %23 : vector<8x4xf32> to vector<8x4x1xf32>
    %25 = vector.broadcast %24 : vector<8x4x1xf32> to vector<8x4x8xf32>
    %26 = arith.subf %22, %25 : vector<8x4x8xf32>
    %27 = math.exp %26 : vector<8x4x8xf32>
    %cst_15 = arith.constant dense<0.000000e+00> : vector<8x4xf32>
    %28 = vector.multi_reduction <add>, %27, %cst_15 [2] : vector<8x4x8xf32> to vector<8x4xf32>
    %29 = vector.shape_cast %28 : vector<8x4xf32> to vector<8x4x1xf32>
    %30 = tpu.reciprocal %29 {approx = true} : vector<8x4x1xf32> -> vector<8x4x1xf32>
    %31 = vector.broadcast %30 : vector<8x4x1xf32> to vector<8x4x8xf32>
    %32 = arith.mulf %27, %31 : vector<8x4x8xf32>
    %33 = vector.extract_strided_slice %14 {offsets = [0, 0, 0], sizes = [8, 8, 8], strides = [1, 1, 1]} : vector<8x8x32xf32> to vector<8x8x8xf32>
    "tpu.trace_start"() <{level = 10 : i32, message = "bqk,bkd->bqd"}> : () -> ()
    %cst_16 = arith.constant dense<0.000000e+00> : vector<8x4x8xf32>
    %34 = tpu.matmul %32, %33, %cst_16 {dimension_numbers = #tpu.dot_dimension_numbers<[2], [1], [1], [2], [0, 0, 0, 1, 1, 2], [0], [0]>} : vector<8x4x8xf32>, vector<8x8x8xf32>, vector<8x4x8xf32> -> vector<8x4x8xf32>
    "tpu.trace_stop"() : () -> ()
    %35 = vector.extract_strided_slice %12 {offsets = [0, 0, 8], sizes = [8, 4, 8], strides = [1, 1, 1]} : vector<8x4x32xf32> to vector<8x4x8xf32>
    %36 = vector.extract_strided_slice %13 {offsets = [0, 0, 8], sizes = [8, 8, 8], strides = [1, 1, 1]} : vector<8x8x32xf32> to vector<8x8x8xf32>
    "tpu.trace_start"() <{level = 10 : i32, message = "bqd,bkd->bqk"}> : () -> ()
    %cst_17 = arith.constant dense<0.000000e+00> : vector<8x4x8xf32>
    %37 = tpu.matmul %35, %36, %cst_17 {dimension_numbers = #tpu.dot_dimension_numbers<[2], [2], [1], [1], [0, 0, 0, 1, 1, 1], [0], [0]>} : vector<8x4x8xf32>, vector<8x8x8xf32>, vector<8x4x8xf32> -> vector<8x4x8xf32>
    "tpu.trace_stop"() : () -> ()
    %38 = arith.addf %37, %16 : vector<8x4x8xf32>
    %cst_18 = arith.constant dense<0xFF800000> : vector<8x4xf32>
    %39 = vector.multi_reduction <maximumf>, %38, %cst_18 [2] : vector<8x4x8xf32> to vector<8x4xf32>
    %40 = vector.shape_cast %39 : vector<8x4xf32> to vector<8x4x1xf32>
    %41 = vector.broadcast %40 : vector<8x4x1xf32> to vector<8x4x8xf32>
    %42 = arith.subf %38, %41 : vector<8x4x8xf32>
    %43 = math.exp %42 : vector<8x4x8xf32>
    %cst_19 = arith.constant dense<0.000000e+00> : vector<8x4xf32>
    %44 = vector.multi_reduction <add>, %43, %cst_19 [2] : vector<8x4x8xf32> to vector<8x4xf32>
    %45 = vector.shape_cast %44 : vector<8x4xf32> to vector<8x4x1xf32>
    %46 = tpu.reciprocal %45 {approx = true} : vector<8x4x1xf32> -> vector<8x4x1xf32>
    %47 = vector.broadcast %46 : vector<8x4x1xf32> to vector<8x4x8xf32>
    %48 = arith.mulf %43, %47 : vector<8x4x8xf32>
    %49 = vector.extract_strided_slice %14 {offsets = [0, 0, 8], sizes = [8, 8, 8], strides = [1, 1, 1]} : vector<8x8x32xf32> to vector<8x8x8xf32>
    "tpu.trace_start"() <{level = 10 : i32, message = "bqk,bkd->bqd"}> : () -> ()
    %cst_20 = arith.constant dense<0.000000e+00> : vector<8x4x8xf32>
    %50 = tpu.matmul %48, %49, %cst_20 {dimension_numbers = #tpu.dot_dimension_numbers<[2], [1], [1], [2], [0, 0, 0, 1, 1, 2], [0], [0]>} : vector<8x4x8xf32>, vector<8x8x8xf32>, vector<8x4x8xf32> -> vector<8x4x8xf32>
    "tpu.trace_stop"() : () -> ()
    %51 = vector.extract_strided_slice %12 {offsets = [0, 0, 16], sizes = [8, 4, 8], strides = [1, 1, 1]} : vector<8x4x32xf32> to vector<8x4x8xf32>
    %52 = vector.extract_strided_slice %13 {offsets = [0, 0, 16], sizes = [8, 8, 8], strides = [1, 1, 1]} : vector<8x8x32xf32> to vector<8x8x8xf32>
    "tpu.trace_start"() <{level = 10 : i32, message = "bqd,bkd->bqk"}> : () -> ()
    %cst_21 = arith.constant dense<0.000000e+00> : vector<8x4x8xf32>
    %53 = tpu.matmul %51, %52, %cst_21 {dimension_numbers = #tpu.dot_dimension_numbers<[2], [2], [1], [1], [0, 0, 0, 1, 1, 1], [0], [0]>} : vector<8x4x8xf32>, vector<8x8x8xf32>, vector<8x4x8xf32> -> vector<8x4x8xf32>
    "tpu.trace_stop"() : () -> ()
    %54 = arith.addf %53, %16 : vector<8x4x8xf32>
    %cst_22 = arith.constant dense<0xFF800000> : vector<8x4xf32>
    %55 = vector.multi_reduction <maximumf>, %54, %cst_22 [2] : vector<8x4x8xf32> to vector<8x4xf32>
    %56 = vector.shape_cast %55 : vector<8x4xf32> to vector<8x4x1xf32>
    %57 = vector.broadcast %56 : vector<8x4x1xf32> to vector<8x4x8xf32>
    %58 = arith.subf %54, %57 : vector<8x4x8xf32>
    %59 = math.exp %58 : vector<8x4x8xf32>
    %cst_23 = arith.constant dense<0.000000e+00> : vector<8x4xf32>
    %60 = vector.multi_reduction <add>, %59, %cst_23 [2] : vector<8x4x8xf32> to vector<8x4xf32>
    %61 = vector.shape_cast %60 : vector<8x4xf32> to vector<8x4x1xf32>
    %62 = tpu.reciprocal %61 {approx = true} : vector<8x4x1xf32> -> vector<8x4x1xf32>
    %63 = vector.broadcast %62 : vector<8x4x1xf32> to vector<8x4x8xf32>
    %64 = arith.mulf %59, %63 : vector<8x4x8xf32>
    %65 = vector.extract_strided_slice %14 {offsets = [0, 0, 16], sizes = [8, 8, 8], strides = [1, 1, 1]} : vector<8x8x32xf32> to vector<8x8x8xf32>
    "tpu.trace_start"() <{level = 10 : i32, message = "bqk,bkd->bqd"}> : () -> ()
    %cst_24 = arith.constant dense<0.000000e+00> : vector<8x4x8xf32>
    %66 = tpu.matmul %64, %65, %cst_24 {dimension_numbers = #tpu.dot_dimension_numbers<[2], [1], [1], [2], [0, 0, 0, 1, 1, 2], [0], [0]>} : vector<8x4x8xf32>, vector<8x8x8xf32>, vector<8x4x8xf32> -> vector<8x4x8xf32>
    "tpu.trace_stop"() : () -> ()
    %67 = vector.extract_strided_slice %12 {offsets = [0, 0, 24], sizes = [8, 4, 8], strides = [1, 1, 1]} : vector<8x4x32xf32> to vector<8x4x8xf32>
    %68 = vector.extract_strided_slice %13 {offsets = [0, 0, 24], sizes = [8, 8, 8], strides = [1, 1, 1]} : vector<8x8x32xf32> to vector<8x8x8xf32>
    "tpu.trace_start"() <{level = 10 : i32, message = "bqd,bkd->bqk"}> : () -> ()
    %cst_25 = arith.constant dense<0.000000e+00> : vector<8x4x8xf32>
    %69 = tpu.matmul %67, %68, %cst_25 {dimension_numbers = #tpu.dot_dimension_numbers<[2], [2], [1], [1], [0, 0, 0, 1, 1, 1], [0], [0]>} : vector<8x4x8xf32>, vector<8x8x8xf32>, vector<8x4x8xf32> -> vector<8x4x8xf32>
    "tpu.trace_stop"() : () -> ()
    %70 = arith.addf %69, %16 : vector<8x4x8xf32>
    %cst_26 = arith.constant dense<0xFF800000> : vector<8x4xf32>
    %71 = vector.multi_reduction <maximumf>, %70, %cst_26 [2] : vector<8x4x8xf32> to vector<8x4xf32>
    %72 = vector.shape_cast %71 : vector<8x4xf32> to vector<8x4x1xf32>
    %73 = vector.broadcast %72 : vector<8x4x1xf32> to vector<8x4x8xf32>
    %74 = arith.subf %70, %73 : vector<8x4x8xf32>
    %75 = math.exp %74 : vector<8x4x8xf32>
    %cst_27 = arith.constant dense<0.000000e+00> : vector<8x4xf32>
    %76 = vector.multi_reduction <add>, %75, %cst_27 [2] : vector<8x4x8xf32> to vector<8x4xf32>
    %77 = vector.shape_cast %76 : vector<8x4xf32> to vector<8x4x1xf32>
    %78 = tpu.reciprocal %77 {approx = true} : vector<8x4x1xf32> -> vector<8x4x1xf32>
    %79 = vector.broadcast %78 : vector<8x4x1xf32> to vector<8x4x8xf32>
    %80 = arith.mulf %75, %79 : vector<8x4x8xf32>
    %81 = vector.extract_strided_slice %14 {offsets = [0, 0, 24], sizes = [8, 8, 8], strides = [1, 1, 1]} : vector<8x8x32xf32> to vector<8x8x8xf32>
    "tpu.trace_start"() <{level = 10 : i32, message = "bqk,bkd->bqd"}> : () -> ()
    %cst_28 = arith.constant dense<0.000000e+00> : vector<8x4x8xf32>
    %82 = tpu.matmul %80, %81, %cst_28 {dimension_numbers = #tpu.dot_dimension_numbers<[2], [1], [1], [2], [0, 0, 0, 1, 1, 2], [0], [0]>} : vector<8x4x8xf32>, vector<8x8x8xf32>, vector<8x4x8xf32> -> vector<8x4x8xf32>
    "tpu.trace_stop"() : () -> ()
    %83 = tpu.concatenate %34, %50, %66, %82 in 2 : vector<8x4x8xf32>, vector<8x4x8xf32>, vector<8x4x8xf32>, vector<8x4x8xf32> -> vector<8x4x32xf32>
    %84 = vector.broadcast %17 : vector<8x4x1xf32> to vector<8x4x32xf32>
    %85 = arith.mulf %83, %84 : vector<8x4x32xf32>
    %86 = vector.shape_cast %85 : vector<8x4x32xf32> to vector<32x32xf32>
    %c0_29 = arith.constant 0 : index
    %c0_30 = arith.constant 0 : index
    %87 = vector.load %arg6[%c0_29, %c0_30] : memref<32x32xf32, #tpu.memory_space<vmem>>, vector<32x32xf32>
    %cst_31 = arith.constant dense<0.000000e+00> : vector<32x32xf32>
    %88 = tpu.matmul %86, %87, %cst_31 {dimension_numbers = #tpu.dot_dimension_numbers<[1], [0], [0], [1], [0, 0, 1, 1], [], []>} : vector<32x32xf32>, vector<32x32xf32>, vector<32x32xf32> -> vector<32x32xf32>
    %c0_32 = arith.constant 0 : index
    %c0_33 = arith.constant 0 : index
    %89 = vector.load %arg7[%c0_32, %c0_33] : memref<1x32xf32, #tpu.memory_space<vmem>>, vector<1x32xf32>
    %90 = vector.broadcast %89 : vector<1x32xf32> to vector<32x32xf32>
    %91 = arith.addf %88, %90 : vector<32x32xf32>
    %cst_34 = arith.constant 0.000000e+00 : f32
    %92 = vector.broadcast %cst_34 : f32 to vector<32x32xf32>
    %93 = arith.maximumf %91, %92 : vector<32x32xf32>
    %94 = vector.shape_cast %18 : vector<8x4x1xf32> to vector<32x1xf32>
    %95 = vector.broadcast %94 : vector<32x1xf32> to vector<32x32xf32>
    %96 = arith.mulf %93, %95 : vector<32x32xf32>
    %c0_35 = arith.constant 0 : index
    %c0_36 = arith.constant 0 : index
    %97 = vector.load %arg8[%c0_35, %c0_36] : memref<32x64xf32, #tpu.memory_space<vmem>>, vector<32x64xf32>
    %cst_37 = arith.constant dense<0.000000e+00> : vector<32x64xf32>
    %98 = tpu.matmul %96, %97, %cst_37 {dimension_numbers = #tpu.dot_dimension_numbers<[1], [0], [0], [1], [0, 0, 1, 1], [], []>} : vector<32x32xf32>, vector<32x64xf32>, vector<32x64xf32> -> vector<32x64xf32>
    %c0_38 = arith.constant 0 : index
    %c0_39 = arith.constant 0 : index
    %99 = vector.load %arg9[%c0_38, %c0_39] : memref<1x64xf32, #tpu.memory_space<vmem>>, vector<1x64xf32>
    %100 = vector.broadcast %99 : vector<1x64xf32> to vector<32x64xf32>
    %101 = arith.addf %98, %100 : vector<32x64xf32>
    %cst_40 = arith.constant 0.000000e+00 : f32
    %102 = vector.broadcast %cst_40 : f32 to vector<32x64xf32>
    %103 = arith.maximumf %101, %102 : vector<32x64xf32>
    %c0_41 = arith.constant 0 : index
    %c0_42 = arith.constant 0 : index
    %104 = vector.load %arg10[%c0_41, %c0_42] : memref<64x64xf32, #tpu.memory_space<vmem>>, vector<64x64xf32>
    %cst_43 = arith.constant dense<0.000000e+00> : vector<32x64xf32>
    %105 = tpu.matmul %103, %104, %cst_43 {dimension_numbers = #tpu.dot_dimension_numbers<[1], [0], [0], [1], [0, 0, 1, 1], [], []>} : vector<32x64xf32>, vector<64x64xf32>, vector<32x64xf32> -> vector<32x64xf32>
    %c0_44 = arith.constant 0 : index
    %c0_45 = arith.constant 0 : index
    %106 = vector.load %arg11[%c0_44, %c0_45] : memref<1x64xf32, #tpu.memory_space<vmem>>, vector<1x64xf32>
    %107 = vector.broadcast %106 : vector<1x64xf32> to vector<32x64xf32>
    %108 = arith.addf %105, %107 : vector<32x64xf32>
    %109 = tpu.iota {dimensions = array<i32: 1>} : vector<1x64xi32>
    %c32_i32 = arith.constant 32 : i32
    %110 = vector.broadcast %c32_i32 : i32 to vector<1x64xi32>
    %111 = arith.cmpi sge, %109, %110 : vector<1x64xi32>
    %cst_46 = arith.constant -1.000000e+01 : f32
    %cst_47 = arith.constant 0.000000e+00 : f32
    %112 = vector.broadcast %cst_46 : f32 to vector<32x64xf32>
    %113 = arith.maximumf %112, %108 : vector<32x64xf32>
    %114 = vector.broadcast %cst_47 : f32 to vector<32x64xf32>
    %115 = arith.minimumf %114, %113 : vector<32x64xf32>
    %116 = vector.shape_cast %111 : vector<1x64xi1> to vector<1x64xi1>
    %117 = vector.broadcast %116 : vector<1x64xi1> to vector<32x64xi1>
    %118 = arith.select %117, %115, %108 : vector<32x64xi1>, vector<32x64xf32>
    %c0_48 = arith.constant 0 : index
    %c0_49 = arith.constant 0 : index
    %119 = vector.load %arg12[%c0_48, %c0_49] : memref<32x64xf32, #tpu.memory_space<vmem>>, vector<32x64xf32>
    tpu.vector_store %arg12[%c0_48, %c0_49], %118 {strides = array<i32>} : memref<32x64xf32, #tpu.memory_space<vmem>>, vector<32x64xf32>,
    return
  }
  func.func @transform_0(%arg0: i32) -> (i32, i32, i32) {
    %c0_i32 = arith.constant 0 : i32
    %c0_i32_0 = arith.constant 0 : i32
    %c0_i32_1 = arith.constant 0 : i32
    return %arg0, %c0_i32, %c0_i32_0 : i32, i32, i32
  }
  func.func @transform_1(%arg0: i32) -> (i32, i32, i32) {
    %c0_i32 = arith.constant 0 : i32
    %c0_i32_0 = arith.constant 0 : i32
    %c0_i32_1 = arith.constant 0 : i32
    return %arg0, %c0_i32, %c0_i32_0 : i32, i32, i32
  }
  func.func @transform_2(%arg0: i32) -> (i32, i32) {
    %c0_i32 = arith.constant 0 : i32
    %c0_i32_0 = arith.constant 0 : i32
    %c0_i32_1 = arith.constant 0 : i32
    return %c0_i32, %c0_i32_0 : i32, i32
  }
  func.func @transform_3(%arg0: i32) -> (i32, i32) {
    %c0_i32 = arith.constant 0 : i32
    %c0_i32_0 = arith.constant 0 : i32
    %c0_i32_1 = arith.constant 0 : i32
    return %c0_i32, %c0_i32_0 : i32, i32
  }
  func.func @transform_4(%arg0: i32) -> (i32, i32) {
    %c0_i32 = arith.constant 0 : i32
    %c0_i32_0 = arith.constant 0 : i32
    %c0_i32_1 = arith.constant 0 : i32
    return %c0_i32, %c0_i32_0 : i32, i32
  }
  func.func @transform_5(%arg0: i32) -> (i32, i32) {
    %c0_i32 = arith.constant 0 : i32
    %c0_i32_0 = arith.constant 0 : i32
    %c0_i32_1 = arith.constant 0 : i32
    return %c0_i32, %c0_i32_0 : i32, i32
  }
  func.func @transform_6(%arg0: i32) -> (i32, i32) {
    %c0_i32 = arith.constant 0 : i32
    %c0_i32_0 = arith.constant 0 : i32
    %c0_i32_1 = arith.constant 0 : i32
    return %c0_i32, %c0_i32_0 : i32, i32
  }
  func.func @transform_7(%arg0: i32) -> (i32, i32) {
    %c0_i32 = arith.constant 0 : i32
    %c0_i32_0 = arith.constant 0 : i32
    %c0_i32_1 = arith.constant 0 : i32
    return %c0_i32, %c0_i32_0 : i32, i32
  }
  func.func @transform_8(%arg0: i32) -> (i32, i32) {
    %c0_i32 = arith.constant 0 : i32
    %c0_i32_0 = arith.constant 0 : i32
    %c0_i32_1 = arith.constant 0 : i32
    return %c0_i32, %c0_i32_0 : i32, i32
  }
  func.func @transform_9(%arg0: i32) -> (i32, i32) {
    %c0_i32 = arith.constant 0 : i32
    %c0_i32_0 = arith.constant 0 : i32
    %c0_i32_1 = arith.constant 0 : i32
    return %c0_i32, %c0_i32_0 : i32, i32
  }
  func.func @transform_10(%arg0: i32) -> (i32, i32) {
    %c0_i32 = arith.constant 0 : i32
    %c0_i32_0 = arith.constant 0 : i32
    %c0_i32_1 = arith.constant 0 : i32
    return %c0_i32, %c0_i32_0 : i32, i32
  }
  func.func @transform_11(%arg0: i32) -> (i32, i32) {
    %c0_i32 = arith.constant 0 : i32
    %c0_i32_0 = arith.constant 0 : i32
    return %arg0, %c0_i32 : i32, i32
  }
}

</mosaic_0001>

<llo_original>
// kernel: tpu_custom_call.1
$region0: #{tpu_custom_call.1}
  #allocation0 [shape = 'u32[]', space=smem, size = 0x4, offset = 0x4, fixed_abs, tag = 'smem constant byte address 0x4 - core index']
  #allocation1 [shape = 'u32[72,128]{1,0:T(1,128)}', space=vmem, size = 0x9000, scoped, tag = 'internal scratch']
  %s0 = inlined_call_operand.hbm [shape: f32[8,8,24], index: 0, kind: input, shape index: {}]
  %s1 = inlined_call_operand.hbm [shape: f32[8,4,10], index: 1, kind: input, shape index: {}]
  %s2 = inlined_call_operand.hbm [shape: f32[24,32], index: 2, kind: input, shape index: {}]
  %s3 = inlined_call_operand.vmem [shape: f32[1,32], index: 3, kind: input, shape index: {}]
  %s4 = inlined_call_operand.hbm [shape: f32[32,96], index: 4, kind: input, shape index: {}]
  %s5 = inlined_call_operand.hbm [shape: f32[32,32], index: 5, kind: input, shape index: {}]
  %s6 = inlined_call_operand.vmem [shape: f32[1,32], index: 6, kind: input, shape index: {}]
  %s7 = inlined_call_operand.hbm [shape: f32[32,64], index: 7, kind: input, shape index: {}]
  %s8 = inlined_call_operand.vmem [shape: f32[1,64], index: 8, kind: input, shape index: {}]
  %s9 = inlined_call_operand.hbm [shape: f32[64,64], index: 9, kind: input, shape index: {}]
  %s10 = inlined_call_operand.vmem [shape: f32[1,64], index: 10, kind: input, shape index: {}]
  %s11 = inlined_call_operand.hbm [shape: f32[32,64], index: 11, kind: output, shape index: {}]
  %s12 = sld [smem:[#allocation0]]
  $region82: #{tpu_custom_call.1} parent=0
    _
  %s14 = ssub.s32 1, %s12
  %s15 = scalar_select 0, %s14, %s12
  $region1: #{tpu_custom_call.1} parent=0
    #allocation2 [shape = 'u8[32768]{0}', space=vmem, size = 0x8000, scoped, tag = 'input window, operand 0, single buffered']
    #allocation3 [shape = 's32[1]{0}', space=sflag, size = 0x4, scoped, tag = 'scoped memory for tpu_custom_call.1']
    #allocation4 [shape = 's32[1]{0}', space=sflag, size = 0x4, scoped, tag = 'scoped memory for tpu_custom_call.1']
    #allocation5 [shape = 'u8[16384]{0}', space=vmem, size = 0x4000, scoped, tag = 'input window, operand 1, single buffered']
    #allocation6 [shape = 's32[1]{0}', space=sflag, size = 0x4, scoped, tag = 'scoped memory for tpu_custom_call.1']
    #allocation7 [shape = 'u8[12288]{0}', space=vmem, size = 0x3000, scoped, tag = 'input window, operand 2, single buffered']
    #allocation8 [shape = 'u8[16384]{0}', space=vmem, size = 0x4000, scoped, tag = 'input window, operand 4, single buffered']
    #allocation9 [shape = 's32[1]{0}', space=sflag, size = 0x4, scoped, tag = 'scoped memory for tpu_custom_call.1']
    #allocation10 [shape = 'u8[16384]{0}', space=vmem, size = 0x4000, scoped, tag = 'input window, operand 5, single buffered']
    #allocation11 [shape = 'u8[16384]{0}', space=vmem, size = 0x4000, scoped, tag = 'input window, operand 7, single buffered']
    #allocation12 [shape = 's32[1]{0}', space=sflag, size = 0x4, scoped, tag = 'scoped memory for tpu_custom_call.1']
    #allocation13 [shape = 'u8[32768]{0}', space=vmem, size = 0x8000, scoped, tag = 'input window, operand 9, single buffered']
    #allocation14 [shape = 'u8[16384]{0}', space=vmem, size = 0x4000, scoped, tag = 'output window, operand 0, single buffered']
    %16 = vsyncpa [#allocation3], 0
    %17 = vsyncpa [#allocation6], 0
    %18 = vsyncpa [#allocation9], 0
    %19 = vsyncpa [#allocation12], 0
    %20 = vsyncpa [#allocation4], 0
    // Predicated region
    $region2: #{tpu_custom_call.1} parent=1 // pred_check
      _
    $region3: #{tpu_custom_call.1} parent=1 // pred_check_branch
      %22 = sbr.rel (0) target = $region5
    $region4: #{tpu_custom_call.1} parent=1 // pred_region
      %24 = vsyncadd [#allocation3], 0
      %s25 = sshll.u32 %s0, 4
      %s26 = int_to_ptr.hbm [resolvable:$true] %s25
      %s27 = sshll.u32 [#allocation2], 4
      %s28 = int_to_ptr.vmem [resolvable:$true] %s27
      %33 = dma.hbm_to_vmem [thread:$0]  %s26, 1024, %s28, [#allocation3], 128, 128, 8
    $region5: #{tpu_custom_call.1} parent=1 // pred_fallthru
      _
    // Predicated region
    $region6: #{tpu_custom_call.1} parent=1 // pred_check
      _
    $region7: #{tpu_custom_call.1} parent=1 // pred_check_branch
      %35 = sbr.rel (0) target = $region9
    $region8: #{tpu_custom_call.1} parent=1 // pred_region
      %37 = vsyncadd [#allocation6], 0
      %s38 = sshll.u32 %s1, 4
      %s39 = int_to_ptr.hbm [resolvable:$true] %s38
      %s40 = sshll.u32 [#allocation5], 4
      %s41 = int_to_ptr.vmem [resolvable:$true] %s40
      %46 = dma.hbm_to_vmem [thread:$0]  %s39, 512, %s41, [#allocation6], 64, 64, 4
    $region9: #{tpu_custom_call.1} parent=1 // pred_fallthru
      _
    // Predicated region
    $region10: #{tpu_custom_call.1} parent=1 // pred_check
      _
    $region11: #{tpu_custom_call.1} parent=1 // pred_check_branch
      %48 = sbr.rel (0) target = $region13
    $region12: #{tpu_custom_call.1} parent=1 // pred_region
      %50 = vsyncadd [#allocation6], 0
      %s51 = sshll.u32 %s2, 4
      %s52 = int_to_ptr.hbm [resolvable:$true] %s51
      %s53 = sshll.u32 [#allocation7], 4
      %s54 = int_to_ptr.vmem [resolvable:$true] %s53
      %59 = dma.hbm_to_vmem [thread:$0]  %s52, 384, %s54, [#allocation6], 128, 128, 8
    $region13: #{tpu_custom_call.1} parent=1 // pred_fallthru
      _
    // Predicated region
    $region14: #{tpu_custom_call.1} parent=1 // pred_check
      _
    $region15: #{tpu_custom_call.1} parent=1 // pred_check_branch
      %61 = sbr.rel (0) target = $region17
    $region16: #{tpu_custom_call.1} parent=1 // pred_region
      _
    $region17: #{tpu_custom_call.1} parent=1 // pred_fallthru
      _
    // Predicated region
    $region18: #{tpu_custom_call.1} parent=1 // pred_check
      _
    $region19: #{tpu_custom_call.1} parent=1 // pred_check_branch
      %63 = sbr.rel (0) target = $region21
    $region20: #{tpu_custom_call.1} parent=1 // pred_region
      %65 = vsyncadd [#allocation9], 0
      %s66 = sshll.u32 %s4, 4
      %s67 = int_to_ptr.hbm [resolvable:$true] %s66
      %s68 = sshll.u32 [#allocation8], 4
      %s69 = int_to_ptr.vmem [resolvable:$true] %s68
      %74 = dma.hbm_to_vmem [thread:$0]  %s67, 512, %s69, [#allocation9], 128, 128, 8
    $region21: #{tpu_custom_call.1} parent=1 // pred_fallthru
      _
    // Predicated region
    $region22: #{tpu_custom_call.1} parent=1 // pred_check
      _
    $region23: #{tpu_custom_call.1} parent=1 // pred_check_branch
      %76 = sbr.rel (0) target = $region25
    $region24: #{tpu_custom_call.1} parent=1 // pred_region
      %78 = vsyncadd [#allocation9], 0
      %s79 = sshll.u32 %s5, 4
      %s80 = int_to_ptr.hbm [resolvable:$true] %s79
      %s81 = sshll.u32 [#allocation10], 4
      %s82 = int_to_ptr.vmem [resolvable:$true] %s81
      %87 = dma.hbm_to_vmem [thread:$0]  %s80, 512, %s82, [#allocation9], 128, 128, 8
    $region25: #{tpu_custom_call.1} parent=1 // pred_fallthru
      _
    // Predicated region
    $region26: #{tpu_custom_call.1} parent=1 // pred_check
      _
    $region27: #{tpu_custom_call.1} parent=1 // pred_check_branch
      %89 = sbr.rel (0) target = $region29
    $region28: #{tpu_custom_call.1} parent=1 // pred_region
      _
    $region29: #{tpu_custom_call.1} parent=1 // pred_fallthru
      _
    // Predicated region
    $region30: #{tpu_custom_call.1} parent=1 // pred_check
      _
    $region31: #{tpu_custom_call.1} parent=1 // pred_check_branch
      %91 = sbr.rel (0) target = $region33
    $region32: #{tpu_custom_call.1} parent=1 // pred_region
      %93 = vsyncadd [#allocation12], 0
      %s94 = sshll.u32 %s7, 4
      %s95 = int_to_ptr.hbm [resolvable:$true] %s94
      %s96 = sshll.u32 [#allocation11], 4
      %s97 = int_to_ptr.vmem [resolvable:$true] %s96
      %102 = dma.hbm_to_vmem [thread:$0]  %s95, 512, %s97, [#allocation12], 128, 128, 8
    $region33: #{tpu_custom_call.1} parent=1 // pred_fallthru
      _
    // Predicated region
    $region34: #{tpu_custom_call.1} parent=1 // pred_check
      _
    $region35: #{tpu_custom_call.1} parent=1 // pred_check_branch
      %104 = sbr.rel (0) target = $region37
    $region36: #{tpu_custom_call.1} parent=1 // pred_region
      _
    $region37: #{tpu_custom_call.1} parent=1 // pred_fallthru
      _
    // Predicated region
    $region38: #{tpu_custom_call.1} parent=1 // pred_check
      _
    $region39: #{tpu_custom_call.1} parent=1 // pred_check_branch
      %106 = sbr.rel (0) target = $region41
    $region40: #{tpu_custom_call.1} parent=1 // pred_region
      %108 = vsyncadd [#allocation12], 0
      %s109 = sshll.u32 %s9, 4
      %s110 = int_to_ptr.hbm [resolvable:$true] %s109
      %s111 = sshll.u32 [#allocation13], 4
      %s112 = int_to_ptr.vmem [resolvable:$true] %s111
      %117 = dma.hbm_to_vmem [thread:$0]  %s110, 1024, %s112, [#allocation12], 128, 128, 8
    $region41: #{tpu_custom_call.1} parent=1 // pred_fallthru
      _
    // Predicated region
    $region42: #{tpu_custom_call.1} parent=1 // pred_check
      _
    $region43: #{tpu_custom_call.1} parent=1 // pred_check_branch
      %119 = sbr.rel (0) target = $region45
    $region44: #{tpu_custom_call.1} parent=1 // pred_region
      _
    $region45: #{tpu_custom_call.1} parent=1 // pred_fallthru
      _
    // Predicated region
    $region46: #{tpu_custom_call.1} parent=1 // pred_check
      _
    $region47: #{tpu_custom_call.1} parent=1 // pred_check_branch
      %121 = sbr.rel (0) target = $region49
    $region48: #{tpu_custom_call.1} parent=1 // pred_region
      %123 = dma.done [#allocation3], 1024
    $region49: #{tpu_custom_call.1} parent=1 // pred_fallthru
      _
    // Predicated region
    $region50: #{tpu_custom_call.1} parent=1 // pred_check
      _
    $region51: #{tpu_custom_call.1} parent=1 // pred_check_branch
      %125 = sbr.rel (0) target = $region53
    $region52: #{tpu_custom_call.1} parent=1 // pred_region
      %127 = dma.done [#allocation6], 512
    $region53: #{tpu_custom_call.1} parent=1 // pred_fallthru
      _
    // Predicated region
    $region54: #{tpu_custom_call.1} parent=1 // pred_check
      _
    $region55: #{tpu_custom_call.1} parent=1 // pred_check_branch
      %129 = sbr.rel (0) target = $region57
    $region56: #{tpu_custom_call.1} parent=1 // pred_region
      %131 = dma.done [#allocation6], 384
    $region57: #{tpu_custom_call.1} parent=1 // pred_fallthru
      _
    // Predicated region
    $region58: #{tpu_custom_call.1} parent=1 // pred_check
      _
    $region59: #{tpu_custom_call.1} parent=1 // pred_check_branch
      %133 = sbr.rel (0) target = $region61
    $region60: #{tpu_custom_call.1} parent=1 // pred_region
      %135 = dma.done [#allocation9], 512
    $region61: #{tpu_custom_call.1} parent=1 // pred_fallthru
      _
    // Predicated region
    $region62: #{tpu_custom_call.1} parent=1 // pred_check
      _
    $region63: #{tpu_custom_call.1} parent=1 // pred_check_branch
      %137 = sbr.rel (0) target = $region65
    $region64: #{tpu_custom_call.1} parent=1 // pred_region
      %139 = dma.done [#allocation9], 512
    $region65: #{tpu_custom_call.1} parent=1 // pred_fallthru
      _
    // Predicated region
    $region66: #{tpu_custom_call.1} parent=1 // pred_check
      _
    $region67: #{tpu_custom_call.1} parent=1 // pred_check_branch
      %141 = sbr.rel (0) target = $region69
    $region68: #{tpu_custom_call.1} parent=1 // pred_region
      %143 = dma.done [#allocation12], 512
    $region69: #{tpu_custom_call.1} parent=1 // pred_fallthru
      _
    // Predicated region
    $region70: #{tpu_custom_call.1} parent=1 // pred_check
      _
    $region71: #{tpu_custom_call.1} parent=1 // pred_check_branch
      %145 = sbr.rel (0) target = $region73
    $region72: #{tpu_custom_call.1} parent=1 // pred_region
      %147 = dma.done [#allocation12], 1024
    $region73: #{tpu_custom_call.1} parent=1 // pred_fallthru
      _
    %v148 = vld [vmem:[#allocation2] sm:$0xff]
    %v149 = vld [vmem:[#allocation2 + $0x8] sm:$0xff]
    %v150 = vld [vmem:[#allocation2 + $0x10] sm:$0xff]
    %v151 = vld [vmem:[#allocation2 + $0x18] sm:$0xff]
    %v152 = vld [vmem:[#allocation2 + $0x20] sm:$0xff]
    %v153 = vld [vmem:[#allocation2 + $0x28] sm:$0xff]
    %v154 = vld [vmem:[#allocation2 + $0x30] sm:$0xff]
    %v155 = vld [vmem:[#allocation2 + $0x38] sm:$0xff]
    %v156 = vld [vmem:[#allocation7] sm:$0xff]
    %v157 = vld [vmem:[#allocation7 + $0x8] sm:$0xff]
    %v158 = vld [vmem:[#allocation7 + $0x10] sm:$0xff]
    %v159 = vld [vmem:[%s3] sm:$0x1]
    %v161 = vperm.slane %v159, 0
    %vm163 = vcmask 195584
    %v165 = vsel %vm163, %v148, 0
    %v168 = vsel %vm163, %v149, 0
    %v171 = vsel %vm163, %v150, 0
    %v174 = vsel %vm163, %v151, 0
    %v177 = vsel %vm163, %v152, 0
    %v180 = vsel %vm163, %v153, 0
    %v183 = vsel %vm163, %v154, 0
    %v186 = vsel %vm163, %v155, 0
    %188 = vmatpush.msra.mxu0 0.0
    %189 = vmatpush.msra.mxu0 0.0
    %190 = vmatpush.msra.mxu0 0.0
    %191 = vmatpush.msra.mxu0 0.0
    %192 = vmatpush.msra.mxu0 0.0
    %193 = vmatpush.msra.mxu0 0.0
    %194 = vmatpush.msra.mxu0 0.0
    %195 = vmatpush.msra.mxu0 0.0
    %196 = vmatpush.msra.mxu0 0.0
    %197 = vmatpush.msra.mxu0 0.0
    %198 = vmatpush.msra.mxu0 0.0
    %199 = vmatpush.msra.mxu0 0.0
    %200 = vmatpush.msra.mxu0 0.0
    %201 = vmatpush.msra.mxu0 %v158
    %202 = vmatpush.msra.mxu0 %v157
    %203 = vmatpush.msra.mxu0 %v156
    %204 = vmatmul.f32.gmra.mxu0 %v165
    %v205 = vpop.f32.mrf.mxu0
    %v206 = vadd.f32 %v161, %v205
    %207 = vmatmul.f32.gmra.mxu0 %v168
    %v208 = vpop.f32.mrf.mxu0
    %v209 = vadd.f32 %v161, %v208
    %210 = vmatmul.f32.gmra.mxu0 %v171
    %v211 = vpop.f32.mrf.mxu0
    %v212 = vadd.f32 %v161, %v211
    %213 = vmatmul.f32.gmra.mxu0 %v174
    %v214 = vpop.f32.mrf.mxu0
    %v215 = vadd.f32 %v161, %v214
    %216 = vmatmul.f32.gmra.mxu0 %v177
    %v217 = vpop.f32.mrf.mxu0
    %v218 = vadd.f32 %v161, %v217
    %219 = vmatmul.f32.gmra.mxu0 %v180
    %v220 = vpop.f32.mrf.mxu0
    %v221 = vadd.f32 %v161, %v220
    %222 = vmatmul.f32.gmra.mxu0 %v183
    %v223 = vpop.f32.mrf.mxu0
    %v224 = vadd.f32 %v161, %v223
    %225 = vmatmul.f32.gmra.mxu0 %v186
    %v226 = vpop.f32.mrf.mxu0
    %v227 = vadd.f32 %v161, %v226
    %228 = vdwg.mxu0
    %v229 = vmax.f32 %v206, 0.0
    %v230 = vmax.f32 %v209, 0.0
    %v231 = vmax.f32 %v212, 0.0
    %v232 = vmax.f32 %v215, 0.0
    %v233 = vmax.f32 %v218, 0.0
    %v234 = vmax.f32 %v221, 0.0
    %v235 = vmax.f32 %v224, 0.0
    %v236 = vmax.f32 %v227, 0.0
    %v237 = vld [vmem:[#allocation8] sm:$0xff]
    %v238 = vld [vmem:[#allocation8 + $0x8] sm:$0xff]
    %v239 = vld [vmem:[#allocation8 + $0x10] sm:$0xff]
    %v240 = vld [vmem:[#allocation8 + $0x18] sm:$0xff]
    %vm241 = vcmask 261120
    %v243 = vsel %vm241, %v229, 0
    %v246 = vsel %vm241, %v230, 0
    %v249 = vsel %vm241, %v231, 0
    %v252 = vsel %vm241, %v232, 0
    %v255 = vsel %vm241, %v233, 0
    %v258 = vsel %vm241, %v234, 0
    %v261 = vsel %vm241, %v235, 0
    %v264 = vsel %vm241, %v236, 0
    %266 = vmatpush.msra.mxu0 0.0
    %267 = vmatpush.msra.mxu0 0.0
    %268 = vmatpush.msra.mxu0 0.0
    %269 = vmatpush.msra.mxu0 0.0
    %270 = vmatpush.msra.mxu0 0.0
    %271 = vmatpush.msra.mxu0 0.0
    %272 = vmatpush.msra.mxu0 0.0
    %273 = vmatpush.msra.mxu0 0.0
    %274 = vmatpush.msra.mxu0 0.0
    %275 = vmatpush.msra.mxu0 0.0
    %276 = vmatpush.msra.mxu0 0.0
    %277 = vmatpush.msra.mxu0 0.0
    %278 = vmatpush.msra.mxu0 %v240
    %279 = vmatpush.msra.mxu0 %v239
    %280 = vmatpush.msra.mxu0 %v238
    %281 = vmatpush.msra.mxu0 %v237
    %282 = vmatmul.f32.gmra.mxu0 %v243
    %v283 = vpop.f32.mrf.mxu0
    %v284 = vadd.f32 0.0, %v283
    %285 = vmatmul.f32.gmra.mxu0 %v246
    %v286 = vpop.f32.mrf.mxu0
    %v287 = vadd.f32 0.0, %v286
    %288 = vmatmul.f32.gmra.mxu0 %v249
    %v289 = vpop.f32.mrf.mxu0
    %v290 = vadd.f32 0.0, %v289
    %291 = vmatmul.f32.gmra.mxu0 %v252
    %v292 = vpop.f32.mrf.mxu0
    %v293 = vadd.f32 0.0, %v292
    %294 = vmatmul.f32.gmra.mxu0 %v255
    %v295 = vpop.f32.mrf.mxu0
    %v296 = vadd.f32 0.0, %v295
    %297 = vmatmul.f32.gmra.mxu0 %v258
    %v298 = vpop.f32.mrf.mxu0
    %v299 = vadd.f32 0.0, %v298
    %300 = vmatmul.f32.gmra.mxu0 %v261
    %v301 = vpop.f32.mrf.mxu0
    %v302 = vadd.f32 0.0, %v301
    %303 = vmatmul.f32.gmra.mxu0 %v264
    %v304 = vpop.f32.mrf.mxu0
    %v305 = vadd.f32 0.0, %v304
    %306 = vdwg.mxu0
    %v307 = vld [vmem:[#allocation5] sm:$0xf]
    %v308 = vld [vmem:[#allocation5 + $0x4] sm:$0xf]
    %v309 = vld [vmem:[#allocation5 + $0x8] sm:$0xf]
    %v310 = vld [vmem:[#allocation5 + $0xc] sm:$0xf]
    %v311 = vld [vmem:[#allocation5 + $0x10] sm:$0xf]
    %v312 = vld [vmem:[#allocation5 + $0x14] sm:$0xf]
    %v313 = vld [vmem:[#allocation5 + $0x18] sm:$0xf]
    %v314 = vld [vmem:[#allocation5 + $0x1c] sm:$0xf]
    %316 = vrot.lane.b32.xlu0 %v284, 96
    %v317 = vpop.permute.xlu0 %316
    %vm318 = vcmask 64512
    %v319 = vsel %vm318, %v284, 0
    %v321 = vsel %vm318, %v317, 0
    %323 = vmatpush.xpose.msra.mxu0 0.0
    %324 = vmatpush.xpose.msra.mxu0 0.0
    %325 = vmatpush.xpose.msra.mxu0 0.0
    %326 = vmatpush.xpose.msra.mxu0 0.0
    %327 = vmatpush.xpose.msra.mxu0 0.0
    %328 = vmatpush.xpose.msra.mxu0 0.0
    %329 = vmatpush.xpose.msra.mxu0 0.0
    %330 = vmatpush.xpose.msra.mxu0 0.0
    %331 = vmatpush.xpose.msra.mxu0 0.0
    %332 = vmatpush.xpose.msra.mxu0 0.0
    %333 = vmatpush.xpose.msra.mxu0 0.0
    %334 = vmatpush.xpose.msra.mxu0 0.0
    %335 = vmatpush.xpose.msra.mxu0 0.0
    %336 = vmatpush.xpose.msra.mxu0 0.0
    %337 = vmatpush.xpose.msra.mxu0 0.0
    %338 = vmatpush.xpose.msra.mxu0 %v321
    %339 = vmatmul.f32.gmra.mxu0 %v319
    %v340 = vpop.f32.mrf.mxu0
    %v341 = vadd.f32 %v307, %v340
    %342 = vdwg.mxu0
    %344 = vrot.lane.b32.xlu0 %v287, 96
    %v345 = vpop.permute.xlu0 %344
    %v346 = vsel %vm318, %v287, 0
    %v348 = vsel %vm318, %v345, 0
    %350 = vmatpush.xpose.msra.mxu0 0.0
    %351 = vmatpush.xpose.msra.mxu0 0.0
    %352 = vmatpush.xpose.msra.mxu0 0.0
    %353 = vmatpush.xpose.msra.mxu0 0.0
    %354 = vmatpush.xpose.msra.mxu0 0.0
    %355 = vmatpush.xpose.msra.mxu0 0.0
    %356 = vmatpush.xpose.msra.mxu0 0.0
    %357 = vmatpush.xpose.msra.mxu0 0.0
    %358 = vmatpush.xpose.msra.mxu0 0.0
    %359 = vmatpush.xpose.msra.mxu0 0.0
    %360 = vmatpush.xpose.msra.mxu0 0.0
    %361 = vmatpush.xpose.msra.mxu0 0.0
    %362 = vmatpush.xpose.msra.mxu0 0.0
    %363 = vmatpush.xpose.msra.mxu0 0.0
    %364 = vmatpush.xpose.msra.mxu0 0.0
    %365 = vmatpush.xpose.msra.mxu0 %v348
    %366 = vmatmul.f32.gmra.mxu0 %v346
    %v367 = vpop.f32.mrf.mxu0
    %v368 = vadd.f32 %v308, %v367
    %369 = vdwg.mxu0
    %371 = vrot.lane.b32.xlu0 %v290, 96
    %v372 = vpop.permute.xlu0 %371
    %v373 = vsel %vm318, %v290, 0
    %v375 = vsel %vm318, %v372, 0
    %377 = vmatpush.xpose.msra.mxu0 0.0
    %378 = vmatpush.xpose.msra.mxu0 0.0
    %379 = vmatpush.xpose.msra.mxu0 0.0
    %380 = vmatpush.xpose.msra.mxu0 0.0
    %381 = vmatpush.xpose.msra.mxu0 0.0
    %382 = vmatpush.xpose.msra.mxu0 0.0
    %383 = vmatpush.xpose.msra.mxu0 0.0
    %384 = vmatpush.xpose.msra.mxu0 0.0
    %385 = vmatpush.xpose.msra.mxu0 0.0
    %386 = vmatpush.xpose.msra.mxu0 0.0
    %387 = vmatpush.xpose.msra.mxu0 0.0
    %388 = vmatpush.xpose.msra.mxu0 0.0
    %389 = vmatpush.xpose.msra.mxu0 0.0
    %390 = vmatpush.xpose.msra.mxu0 0.0
    %391 = vmatpush.xpose.msra.mxu0 0.0
    %392 = vmatpush.xpose.msra.mxu0 %v375
    %393 = vmatmul.f32.gmra.mxu0 %v373
    %v394 = vpop.f32.mrf.mxu0
    %v395 = vadd.f32 %v309, %v394
    %396 = vdwg.mxu0
    %398 = vrot.lane.b32.xlu0 %v293, 96
    %v399 = vpop.permute.xlu0 %398
    %v400 = vsel %vm318, %v293, 0
    %v402 = vsel %vm318, %v399, 0
    %404 = vmatpush.xpose.msra.mxu0 0.0
    %405 = vmatpush.xpose.msra.mxu0 0.0
    %406 = vmatpush.xpose.msra.mxu0 0.0
    %407 = vmatpush.xpose.msra.mxu0 0.0
    %408 = vmatpush.xpose.msra.mxu0 0.0
    %409 = vmatpush.xpose.msra.mxu0 0.0
    %410 = vmatpush.xpose.msra.mxu0 0.0
    %411 = vmatpush.xpose.msra.mxu0 0.0
    %412 = vmatpush.xpose.msra.mxu0 0.0
    %413 = vmatpush.xpose.msra.mxu0 0.0
    %414 = vmatpush.xpose.msra.mxu0 0.0
    %415 = vmatpush.xpose.msra.mxu0 0.0
    %416 = vmatpush.xpose.msra.mxu0 0.0
    %417 = vmatpush.xpose.msra.mxu0 0.0
    %418 = vmatpush.xpose.msra.mxu0 0.0
    %419 = vmatpush.xpose.msra.mxu0 %v402
    %420 = vmatmul.f32.gmra.mxu0 %v400
    %v421 = vpop.f32.mrf.mxu0
    %v422 = vadd.f32 %v310, %v421
    %423 = vdwg.mxu0
    %425 = vrot.lane.b32.xlu0 %v296, 96
    %v426 = vpop.permute.xlu0 %425
    %v427 = vsel %vm318, %v296, 0
    %v429 = vsel %vm318, %v426, 0
    %431 = vmatpush.xpose.msra.mxu0 0.0
    %432 = vmatpush.xpose.msra.mxu0 0.0
    %433 = vmatpush.xpose.msra.mxu0 0.0
    %434 = vmatpush.xpose.msra.mxu0 0.0
    %435 = vmatpush.xpose.msra.mxu0 0.0
    %436 = vmatpush.xpose.msra.mxu0 0.0
    %437 = vmatpush.xpose.msra.mxu0 0.0
    %438 = vmatpush.xpose.msra.mxu0 0.0
    %439 = vmatpush.xpose.msra.mxu0 0.0
    %440 = vmatpush.xpose.msra.mxu0 0.0
    %441 = vmatpush.xpose.msra.mxu0 0.0
    %442 = vmatpush.xpose.msra.mxu0 0.0
    %443 = vmatpush.xpose.msra.mxu0 0.0
    %444 = vmatpush.xpose.msra.mxu0 0.0
    %445 = vmatpush.xpose.msra.mxu0 0.0
    %446 = vmatpush.xpose.msra.mxu0 %v429
    %447 = vmatmul.f32.gmra.mxu0 %v427
    %v448 = vpop.f32.mrf.mxu0
    %v449 = vadd.f32 %v311, %v448
    %450 = vdwg.mxu0
    %452 = vrot.lane.b32.xlu0 %v299, 96
    %v453 = vpop.permute.xlu0 %452
    %v454 = vsel %vm318, %v299, 0
    %v456 = vsel %vm318, %v453, 0
    %458 = vmatpush.xpose.msra.mxu0 0.0
    %459 = vmatpush.xpose.msra.mxu0 0.0
    %460 = vmatpush.xpose.msra.mxu0 0.0
    %461 = vmatpush.xpose.msra.mxu0 0.0
    %462 = vmatpush.xpose.msra.mxu0 0.0
    %463 = vmatpush.xpose.msra.mxu0 0.0
    %464 = vmatpush.xpose.msra.mxu0 0.0
    %465 = vmatpush.xpose.msra.mxu0 0.0
    %466 = vmatpush.xpose.msra.mxu0 0.0
    %467 = vmatpush.xpose.msra.mxu0 0.0
    %468 = vmatpush.xpose.msra.mxu0 0.0
    %469 = vmatpush.xpose.msra.mxu0 0.0
    %470 = vmatpush.xpose.msra.mxu0 0.0
    %471 = vmatpush.xpose.msra.mxu0 0.0
    %472 = vmatpush.xpose.msra.mxu0 0.0
    %473 = vmatpush.xpose.msra.mxu0 %v456
    %474 = vmatmul.f32.gmra.mxu0 %v454
    %v475 = vpop.f32.mrf.mxu0
    %v476 = vadd.f32 %v312, %v475
    %477 = vdwg.mxu0
    %479 = vrot.lane.b32.xlu0 %v302, 96
    %v480 = vpop.permute.xlu0 %479
    %v481 = vsel %vm318, %v302, 0
    %v483 = vsel %vm318, %v480, 0
    %485 = vmatpush.xpose.msra.mxu0 0.0
    %486 = vmatpush.xpose.msra.mxu0 0.0
    %487 = vmatpush.xpose.msra.mxu0 0.0
    %488 = vmatpush.xpose.msra.mxu0 0.0
    %489 = vmatpush.xpose.msra.mxu0 0.0
    %490 = vmatpush.xpose.msra.mxu0 0.0
    %491 = vmatpush.xpose.msra.mxu0 0.0
    %492 = vmatpush.xpose.msra.mxu0 0.0
    %493 = vmatpush.xpose.msra.mxu0 0.0
    %494 = vmatpush.xpose.msra.mxu0 0.0
    %495 = vmatpush.xpose.msra.mxu0 0.0
    %496 = vmatpush.xpose.msra.mxu0 0.0
    %497 = vmatpush.xpose.msra.mxu0 0.0
    %498 = vmatpush.xpose.msra.mxu0 0.0
    %499 = vmatpush.xpose.msra.mxu0 0.0
    %500 = vmatpush.xpose.msra.mxu0 %v483
    %501 = vmatmul.f32.gmra.mxu0 %v481
    %v502 = vpop.f32.mrf.mxu0
    %v503 = vadd.f32 %v313, %v502
    %504 = vdwg.mxu0
    %506 = vrot.lane.b32.xlu0 %v305, 96
    %v507 = vpop.permute.xlu0 %506
    %v508 = vsel %vm318, %v305, 0
    %v510 = vsel %vm318, %v507, 0
    %512 = vmatpush.xpose.msra.mxu0 0.0
    %513 = vmatpush.xpose.msra.mxu0 0.0
    %514 = vmatpush.xpose.msra.mxu0 0.0
    %515 = vmatpush.xpose.msra.mxu0 0.0
    %516 = vmatpush.xpose.msra.mxu0 0.0
    %517 = vmatpush.xpose.msra.mxu0 0.0
    %518 = vmatpush.xpose.msra.mxu0 0.0
    %519 = vmatpush.xpose.msra.mxu0 0.0
    %520 = vmatpush.xpose.msra.mxu0 0.0
    %521 = vmatpush.xpose.msra.mxu0 0.0
    %522 = vmatpush.xpose.msra.mxu0 0.0
    %523 = vmatpush.xpose.msra.mxu0 0.0
    %524 = vmatpush.xpose.msra.mxu0 0.0
    %525 = vmatpush.xpose.msra.mxu0 0.0
    %526 = vmatpush.xpose.msra.mxu0 0.0
    %527 = vmatpush.xpose.msra.mxu0 %v510
    %528 = vmatmul.f32.gmra.mxu0 %v508
    %v529 = vpop.f32.mrf.mxu0
    %v530 = vadd.f32 %v314, %v529
    %531 = vdwg.mxu0
    %vm532 = vcmask 60416
    %v533 = vsel %vm532, %v341, -inf
    %534 = vmax.xlane.f32.xlu0 %v533
    %v535 = vpop.xlane.xlu0 %534
    %v536 = vsel %vm532, %v368, -inf
    %537 = vmax.xlane.f32.xlu0 %v536
    %v538 = vpop.xlane.xlu0 %537
    %v539 = vsel %vm532, %v395, -inf
    %540 = vmax.xlane.f32.xlu0 %v539
    %v541 = vpop.xlane.xlu0 %540
    %v542 = vsel %vm532, %v422, -inf
    %543 = vmax.xlane.f32.xlu0 %v542
    %v544 = vpop.xlane.xlu0 %543
    %v545 = vsel %vm532, %v449, -inf
    %546 = vmax.xlane.f32.xlu0 %v545
    %v547 = vpop.xlane.xlu0 %546
    %v548 = vsel %vm532, %v476, -inf
    %549 = vmax.xlane.f32.xlu0 %v548
    %v550 = vpop.xlane.xlu0 %549
    %v551 = vsel %vm532, %v503, -inf
    %552 = vmax.xlane.f32.xlu0 %v551
    %v553 = vpop.xlane.xlu0 %552
    %v554 = vsel %vm532, %v530, -inf
    %555 = vmax.xlane.f32.xlu0 %v554
    %v556 = vpop.xlane.xlu0 %555
    %v557 = vsub.f32 %v341, %v535
    %v558 = vsub.f32 %v368, %v538
    %v559 = vsub.f32 %v395, %v541
    %v560 = vsub.f32 %v422, %v544
    %v561 = vsub.f32 %v449, %v547
    %v562 = vsub.f32 %v476, %v550
    %v563 = vsub.f32 %v503, %v553
    %v564 = vsub.f32 %v530, %v556
    %v565 = vmul.f32 %v557, 1.442695
    %v566 = vpow.pop %v565
    %v567 = vmul.f32 %v558, 1.442695
    %v568 = vpow.pop %v567
    %v569 = vmul.f32 %v559, 1.442695
    %v570 = vpow.pop %v569
    %v571 = vmul.f32 %v560, 1.442695
    %v572 = vpow.pop %v571
    %v573 = vmul.f32 %v561, 1.442695
    %v574 = vpow.pop %v573
    %v575 = vmul.f32 %v562, 1.442695
    %v576 = vpow.pop %v575
    %v577 = vmul.f32 %v563, 1.442695
    %v578 = vpow.pop %v577
    %v579 = vmul.f32 %v564, 1.442695
    %v580 = vpow.pop %v579
    %v581 = vsel %vm532, %v566, 0.0
    %582 = vadd.xlane.f32.xlu0 %v581
    %v583 = vpop.xlane.xlu0 %582
    %v584 = vsel %vm532, %v568, 0.0
    %585 = vadd.xlane.f32.xlu0 %v584
    %v586 = vpop.xlane.xlu0 %585
    %v587 = vsel %vm532, %v570, 0.0
    %588 = vadd.xlane.f32.xlu0 %v587
    %v589 = vpop.xlane.xlu0 %588
    %v590 = vsel %vm532, %v572, 0.0
    %591 = vadd.xlane.f32.xlu0 %v590
    %v592 = vpop.xlane.xlu0 %591
    %v593 = vsel %vm532, %v574, 0.0
    %594 = vadd.xlane.f32.xlu0 %v593
    %v595 = vpop.xlane.xlu0 %594
    %v596 = vsel %vm532, %v576, 0.0
    %597 = vadd.xlane.f32.xlu0 %v596
    %v598 = vpop.xlane.xlu0 %597
    %v599 = vsel %vm532, %v578, 0.0
    %600 = vadd.xlane.f32.xlu0 %v599
    %v601 = vpop.xlane.xlu0 %600
    %v602 = vsel %vm532, %v580, 0.0
    %603 = vadd.xlane.f32.xlu0 %v602
    %v604 = vpop.xlane.xlu0 %603
    %v605 = vrcp.pop %v583
    %v606 = vrcp.pop %v586
    %v607 = vrcp.pop %v589
    %v608 = vrcp.pop %v592
    %v609 = vrcp.pop %v595
    %v610 = vrcp.pop %v598
    %v611 = vrcp.pop %v601
    %v612 = vrcp.pop %v604
    %v613 = vmul.f32 %v566, %v605
    %v614 = vmul.f32 %v568, %v606
    %v615 = vmul.f32 %v570, %v607
    %v616 = vmul.f32 %v572, %v608
    %v617 = vmul.f32 %v574, %v609
    %v618 = vmul.f32 %v576, %v610
    %v619 = vmul.f32 %v578, %v611
    %v620 = vmul.f32 %v580, %v612
    %621 = vrot.lane.b32.xlu0 %v284, 64
    %v622 = vpop.permute.xlu0 %621
    %v625 = vsel %vm318, %v613, 0
    %627 = vmatpush.msra.mxu0 0.0
    %628 = vmatpush.msra.mxu0 0.0
    %629 = vmatpush.msra.mxu0 0.0
    %630 = vmatpush.msra.mxu0 0.0
    %631 = vmatpush.msra.mxu0 0.0
    %632 = vmatpush.msra.mxu0 0.0
    %633 = vmatpush.msra.mxu0 0.0
    %634 = vmatpush.msra.mxu0 0.0
    %635 = vmatpush.msra.mxu0 0.0
    %636 = vmatpush.msra.mxu0 0.0
    %637 = vmatpush.msra.mxu0 0.0
    %638 = vmatpush.msra.mxu0 0.0
    %639 = vmatpush.msra.mxu0 0.0
    %640 = vmatpush.msra.mxu0 0.0
    %641 = vmatpush.msra.mxu0 0.0
    %642 = vmatpush.msra.mxu0 %v622
    %643 = vmatmul.f32.gmra.mxu0 %v625
    %v644 = vpop.f32.mrf.mxu0
    %v645 = vadd.f32 0.0, %v644
    %646 = vdwg.mxu0
    %647 = vrot.lane.b32.xlu0 %v287, 64
    %v648 = vpop.permute.xlu0 %647
    %v651 = vsel %vm318, %v614, 0
    %653 = vmatpush.msra.mxu0 0.0
    %654 = vmatpush.msra.mxu0 0.0
    %655 = vmatpush.msra.mxu0 0.0
    %656 = vmatpush.msra.mxu0 0.0
    %657 = vmatpush.msra.mxu0 0.0
    %658 = vmatpush.msra.mxu0 0.0
    %659 = vmatpush.msra.mxu0 0.0
    %660 = vmatpush.msra.mxu0 0.0
    %661 = vmatpush.msra.mxu0 0.0
    %662 = vmatpush.msra.mxu0 0.0
    %663 = vmatpush.msra.mxu0 0.0
    %664 = vmatpush.msra.mxu0 0.0
    %665 = vmatpush.msra.mxu0 0.0
    %666 = vmatpush.msra.mxu0 0.0
    %667 = vmatpush.msra.mxu0 0.0
    %668 = vmatpush.msra.mxu0 %v648
    %669 = vmatmul.f32.gmra.mxu0 %v651
    %v670 = vpop.f32.mrf.mxu0
    %v671 = vadd.f32 0.0, %v670
    %672 = vdwg.mxu0
    %673 = vrot.lane.b32.xlu0 %v290, 64
    %v674 = vpop.permute.xlu0 %673
    %v677 = vsel %vm318, %v615, 0
    %679 = vmatpush.msra.mxu0 0.0
    %680 = vmatpush.msra.mxu0 0.0
    %681 = vmatpush.msra.mxu0 0.0
    %682 = vmatpush.msra.mxu0 0.0
    %683 = vmatpush.msra.mxu0 0.0
    %684 = vmatpush.msra.mxu0 0.0
    %685 = vmatpush.msra.mxu0 0.0
    %686 = vmatpush.msra.mxu0 0.0
    %687 = vmatpush.msra.mxu0 0.0
    %688 = vmatpush.msra.mxu0 0.0
    %689 = vmatpush.msra.mxu0 0.0
    %690 = vmatpush.msra.mxu0 0.0
    %691 = vmatpush.msra.mxu0 0.0
    %692 = vmatpush.msra.mxu0 0.0
    %693 = vmatpush.msra.mxu0 0.0
    %694 = vmatpush.msra.mxu0 %v674
    %695 = vmatmul.f32.gmra.mxu0 %v677
    %v696 = vpop.f32.mrf.mxu0
    %v697 = vadd.f32 0.0, %v696
    %698 = vdwg.mxu0
    %699 = vrot.lane.b32.xlu0 %v293, 64
    %v700 = vpop.permute.xlu0 %699
    %v703 = vsel %vm318, %v616, 0
    %705 = vmatpush.msra.mxu0 0.0
    %706 = vmatpush.msra.mxu0 0.0
    %707 = vmatpush.msra.mxu0 0.0
    %708 = vmatpush.msra.mxu0 0.0
    %709 = vmatpush.msra.mxu0 0.0
    %710 = vmatpush.msra.mxu0 0.0
    %711 = vmatpush.msra.mxu0 0.0
    %712 = vmatpush.msra.mxu0 0.0
    %713 = vmatpush.msra.mxu0 0.0
    %714 = vmatpush.msra.mxu0 0.0
    %715 = vmatpush.msra.mxu0 0.0
    %716 = vmatpush.msra.mxu0 0.0
    %717 = vmatpush.msra.mxu0 0.0
    %718 = vmatpush.msra.mxu0 0.0
    %719 = vmatpush.msra.mxu0 0.0
    %720 = vmatpush.msra.mxu0 %v700
    %721 = vmatmul.f32.gmra.mxu0 %v703
    %v722 = vpop.f32.mrf.mxu0
    %v723 = vadd.f32 0.0, %v722
    %724 = vdwg.mxu0
    %725 = vrot.lane.b32.xlu0 %v296, 64
    %v726 = vpop.permute.xlu0 %725
    %v729 = vsel %vm318, %v617, 0
    %731 = vmatpush.msra.mxu0 0.0
    %732 = vmatpush.msra.mxu0 0.0
    %733 = vmatpush.msra.mxu0 0.0
    %734 = vmatpush.msra.mxu0 0.0
    %735 = vmatpush.msra.mxu0 0.0
    %736 = vmatpush.msra.mxu0 0.0
    %737 = vmatpush.msra.mxu0 0.0
    %738 = vmatpush.msra.mxu0 0.0
    %739 = vmatpush.msra.mxu0 0.0
    %740 = vmatpush.msra.mxu0 0.0
    %741 = vmatpush.msra.mxu0 0.0
    %742 = vmatpush.msra.mxu0 0.0
    %743 = vmatpush.msra.mxu0 0.0
    %744 = vmatpush.msra.mxu0 0.0
    %745 = vmatpush.msra.mxu0 0.0
    %746 = vmatpush.msra.mxu0 %v726
    %747 = vmatmul.f32.gmra.mxu0 %v729
    %v748 = vpop.f32.mrf.mxu0
    %v749 = vadd.f32 0.0, %v748
    %750 = vdwg.mxu0
    %751 = vrot.lane.b32.xlu0 %v299, 64
    %v752 = vpop.permute.xlu0 %751
    %v755 = vsel %vm318, %v618, 0
    %757 = vmatpush.msra.mxu0 0.0
    %758 = vmatpush.msra.mxu0 0.0
    %759 = vmatpush.msra.mxu0 0.0
    %760 = vmatpush.msra.mxu0 0.0
    %761 = vmatpush.msra.mxu0 0.0
    %762 = vmatpush.msra.mxu0 0.0
    %763 = vmatpush.msra.mxu0 0.0
    %764 = vmatpush.msra.mxu0 0.0
    %765 = vmatpush.msra.mxu0 0.0
    %766 = vmatpush.msra.mxu0 0.0
    %767 = vmatpush.msra.mxu0 0.0
    %768 = vmatpush.msra.mxu0 0.0
    %769 = vmatpush.msra.mxu0 0.0
    %770 = vmatpush.msra.mxu0 0.0
    %771 = vmatpush.msra.mxu0 0.0
    %772 = vmatpush.msra.mxu0 %v752
    %773 = vmatmul.f32.gmra.mxu0 %v755
    %v774 = vpop.f32.mrf.mxu0
    %v775 = vadd.f32 0.0, %v774
    %776 = vdwg.mxu0
    %777 = vrot.lane.b32.xlu0 %v302, 64
    %v778 = vpop.permute.xlu0 %777
    %v781 = vsel %vm318, %v619, 0
    %783 = vmatpush.msra.mxu0 0.0
    %784 = vmatpush.msra.mxu0 0.0
    %785 = vmatpush.msra.mxu0 0.0
    %786 = vmatpush.msra.mxu0 0.0
    %787 = vmatpush.msra.mxu0 0.0
    %788 = vmatpush.msra.mxu0 0.0
    %789 = vmatpush.msra.mxu0 0.0
    %790 = vmatpush.msra.mxu0 0.0
    %791 = vmatpush.msra.mxu0 0.0
    %792 = vmatpush.msra.mxu0 0.0
    %793 = vmatpush.msra.mxu0 0.0
    %794 = vmatpush.msra.mxu0 0.0
    %795 = vmatpush.msra.mxu0 0.0
    %796 = vmatpush.msra.mxu0 0.0
    %797 = vmatpush.msra.mxu0 0.0
    %798 = vmatpush.msra.mxu0 %v778
    %799 = vmatmul.f32.gmra.mxu0 %v781
    %v800 = vpop.f32.mrf.mxu0
    %v801 = vadd.f32 0.0, %v800
    %802 = vdwg.mxu0
    %803 = vrot.lane.b32.xlu0 %v305, 64
    %v804 = vpop.permute.xlu0 %803
    %v807 = vsel %vm318, %v620, 0
    %809 = vmatpush.msra.mxu0 0.0
    %810 = vmatpush.msra.mxu0 0.0
    %811 = vmatpush.msra.mxu0 0.0
    %812 = vmatpush.msra.mxu0 0.0
    %813 = vmatpush.msra.mxu0 0.0
    %814 = vmatpush.msra.mxu0 0.0
    %815 = vmatpush.msra.mxu0 0.0
    %816 = vmatpush.msra.mxu0 0.0
    %817 = vmatpush.msra.mxu0 0.0
    %818 = vmatpush.msra.mxu0 0.0
    %819 = vmatpush.msra.mxu0 0.0
    %820 = vmatpush.msra.mxu0 0.0
    %821 = vmatpush.msra.mxu0 0.0
    %822 = vmatpush.msra.mxu0 0.0
    %823 = vmatpush.msra.mxu0 0.0
    %824 = vmatpush.msra.mxu0 %v804
    %825 = vmatmul.f32.gmra.mxu0 %v807
    %v826 = vpop.f32.mrf.mxu0
    %v827 = vadd.f32 0.0, %v826
    %828 = vdwg.mxu0
    %829 = vrot.lane.b32.xlu0 %v284, 120
    %v830 = vpop.permute.xlu0 %829
    %831 = vrot.lane.b32.xlu0 %v284, 88
    %v832 = vpop.permute.xlu0 %831
    %v833 = vsel %vm318, %v830, 0
    %v835 = vsel %vm318, %v832, 0
    %837 = vmatpush.xpose.msra.mxu0 0.0
    %838 = vmatpush.xpose.msra.mxu0 0.0
    %839 = vmatpush.xpose.msra.mxu0 0.0
    %840 = vmatpush.xpose.msra.mxu0 0.0
    %841 = vmatpush.xpose.msra.mxu0 0.0
    %842 = vmatpush.xpose.msra.mxu0 0.0
    %843 = vmatpush.xpose.msra.mxu0 0.0
    %844 = vmatpush.xpose.msra.mxu0 0.0
    %845 = vmatpush.xpose.msra.mxu0 0.0
    %846 = vmatpush.xpose.msra.mxu0 0.0
    %847 = vmatpush.xpose.msra.mxu0 0.0
    %848 = vmatpush.xpose.msra.mxu0 0.0
    %849 = vmatpush.xpose.msra.mxu0 0.0
    %850 = vmatpush.xpose.msra.mxu0 0.0
    %851 = vmatpush.xpose.msra.mxu0 0.0
    %852 = vmatpush.xpose.msra.mxu0 %v835
    %853 = vmatmul.f32.gmra.mxu0 %v833
    %v854 = vpop.f32.mrf.mxu0
    %v855 = vadd.f32 %v307, %v854
    %856 = vdwg.mxu0
    %857 = vrot.lane.b32.xlu0 %v287, 120
    %v858 = vpop.permute.xlu0 %857
    %859 = vrot.lane.b32.xlu0 %v287, 88
    %v860 = vpop.permute.xlu0 %859
    %v861 = vsel %vm318, %v858, 0
    %v863 = vsel %vm318, %v860, 0
    %865 = vmatpush.xpose.msra.mxu0 0.0
    %866 = vmatpush.xpose.msra.mxu0 0.0
    %867 = vmatpush.xpose.msra.mxu0 0.0
    %868 = vmatpush.xpose.msra.mxu0 0.0
    %869 = vmatpush.xpose.msra.mxu0 0.0
    %870 = vmatpush.xpose.msra.mxu0 0.0
    %871 = vmatpush.xpose.msra.mxu0 0.0
    %872 = vmatpush.xpose.msra.mxu0 0.0
    %873 = vmatpush.xpose.msra.mxu0 0.0
    %874 = vmatpush.xpose.msra.mxu0 0.0
    %875 = vmatpush.xpose.msra.mxu0 0.0
    %876 = vmatpush.xpose.msra.mxu0 0.0
    %877 = vmatpush.xpose.msra.mxu0 0.0
    %878 = vmatpush.xpose.msra.mxu0 0.0
    %879 = vmatpush.xpose.msra.mxu0 0.0
    %880 = vmatpush.xpose.msra.mxu0 %v863
    %881 = vmatmul.f32.gmra.mxu0 %v861
    %v882 = vpop.f32.mrf.mxu0
    %v883 = vadd.f32 %v308, %v882
    %884 = vdwg.mxu0
    %885 = vrot.lane.b32.xlu0 %v290, 120
    %v886 = vpop.permute.xlu0 %885
    %887 = vrot.lane.b32.xlu0 %v290, 88
    %v888 = vpop.permute.xlu0 %887
    %v889 = vsel %vm318, %v886, 0
    %v891 = vsel %vm318, %v888, 0
    %893 = vmatpush.xpose.msra.mxu0 0.0
    %894 = vmatpush.xpose.msra.mxu0 0.0
    %895 = vmatpush.xpose.msra.mxu0 0.0
    %896 = vmatpush.xpose.msra.mxu0 0.0
    %897 = vmatpush.xpose.msra.mxu0 0.0
    %898 = vmatpush.xpose.msra.mxu0 0.0
    %899 = vmatpush.xpose.msra.mxu0 0.0
    %900 = vmatpush.xpose.msra.mxu0 0.0
    %901 = vmatpush.xpose.msra.mxu0 0.0
    %902 = vmatpush.xpose.msra.mxu0 0.0
    %903 = vmatpush.xpose.msra.mxu0 0.0
    %904 = vmatpush.xpose.msra.mxu0 0.0
    %905 = vmatpush.xpose.msra.mxu0 0.0
    %906 = vmatpush.xpose.msra.mxu0 0.0
    %907 = vmatpush.xpose.msra.mxu0 0.0
    %908 = vmatpush.xpose.msra.mxu0 %v891
    %909 = vmatmul.f32.gmra.mxu0 %v889
    %v910 = vpop.f32.mrf.mxu0
    %v911 = vadd.f32 %v309, %v910
    %912 = vdwg.mxu0
    %913 = vrot.lane.b32.xlu0 %v293, 120
    %v914 = vpop.permute.xlu0 %913
    %915 = vrot.lane.b32.xlu0 %v293, 88
    %v916 = vpop.permute.xlu0 %915
    %v917 = vsel %vm318, %v914, 0
    %v919 = vsel %vm318, %v916, 0
    %921 = vmatpush.xpose.msra.mxu0 0.0
    %922 = vmatpush.xpose.msra.mxu0 0.0
    %923 = vmatpush.xpose.msra.mxu0 0.0
    %924 = vmatpush.xpose.msra.mxu0 0.0
    %925 = vmatpush.xpose.msra.mxu0 0.0
    %926 = vmatpush.xpose.msra.mxu0 0.0
    %927 = vmatpush.xpose.msra.mxu0 0.0
    %928 = vmatpush.xpose.msra.mxu0 0.0
    %929 = vmatpush.xpose.msra.mxu0 0.0
    %930 = vmatpush.xpose.msra.mxu0 0.0
    %931 = vmatpush.xpose.msra.mxu0 0.0
    %932 = vmatpush.xpose.msra.mxu0 0.0
    %933 = vmatpush.xpose.msra.mxu0 0.0
    %934 = vmatpush.xpose.msra.mxu0 0.0
    %935 = vmatpush.xpose.msra.mxu0 0.0
    %936 = vmatpush.xpose.msra.mxu0 %v919
    %937 = vmatmul.f32.gmra.mxu0 %v917
    %v938 = vpop.f32.mrf.mxu0
    %v939 = vadd.f32 %v310, %v938
    %940 = vdwg.mxu0
    %941 = vrot.lane.b32.xlu0 %v296, 120
    %v942 = vpop.permute.xlu0 %941
    %943 = vrot.lane.b32.xlu0 %v296, 88
    %v944 = vpop.permute.xlu0 %943
    %v945 = vsel %vm318, %v942, 0
    %v947 = vsel %vm318, %v944, 0
    %949 = vmatpush.xpose.msra.mxu0 0.0
    %950 = vmatpush.xpose.msra.mxu0 0.0
    %951 = vmatpush.xpose.msra.mxu0 0.0
    %952 = vmatpush.xpose.msra.mxu0 0.0
    %953 = vmatpush.xpose.msra.mxu0 0.0
    %954 = vmatpush.xpose.msra.mxu0 0.0
    %955 = vmatpush.xpose.msra.mxu0 0.0
    %956 = vmatpush.xpose.msra.mxu0 0.0
    %957 = vmatpush.xpose.msra.mxu0 0.0
    %958 = vmatpush.xpose.msra.mxu0 0.0
    %959 = vmatpush.xpose.msra.mxu0 0.0
    %960 = vmatpush.xpose.msra.mxu0 0.0
    %961 = vmatpush.xpose.msra.mxu0 0.0
    %962 = vmatpush.xpose.msra.mxu0 0.0
    %963 = vmatpush.xpose.msra.mxu0 0.0
    %964 = vmatpush.xpose.msra.mxu0 %v947
    %965 = vmatmul.f32.gmra.mxu0 %v945
    %v966 = vpop.f32.mrf.mxu0
    %v967 = vadd.f32 %v311, %v966
    %968 = vdwg.mxu0
    %969 = vrot.lane.b32.xlu0 %v299, 120
    %v970 = vpop.permute.xlu0 %969
    %971 = vrot.lane.b32.xlu0 %v299, 88
    %v972 = vpop.permute.xlu0 %971
    %v973 = vsel %vm318, %v970, 0
    %v975 = vsel %vm318, %v972, 0
    %977 = vmatpush.xpose.msra.mxu0 0.0
    %978 = vmatpush.xpose.msra.mxu0 0.0
    %979 = vmatpush.xpose.msra.mxu0 0.0
    %980 = vmatpush.xpose.msra.mxu0 0.0
    %981 = vmatpush.xpose.msra.mxu0 0.0
    %982 = vmatpush.xpose.msra.mxu0 0.0
    %983 = vmatpush.xpose.msra.mxu0 0.0
    %984 = vmatpush.xpose.msra.mxu0 0.0
    %985 = vmatpush.xpose.msra.mxu0 0.0
    %986 = vmatpush.xpose.msra.mxu0 0.0
    %987 = vmatpush.xpose.msra.mxu0 0.0
    %988 = vmatpush.xpose.msra.mxu0 0.0
    %989 = vmatpush.xpose.msra.mxu0 0.0
    %990 = vmatpush.xpose.msra.mxu0 0.0
    %991 = vmatpush.xpose.msra.mxu0 0.0
    %992 = vmatpush.xpose.msra.mxu0 %v975
    %993 = vmatmul.f32.gmra.mxu0 %v973
    %v994 = vpop.f32.mrf.mxu0
    %v995 = vadd.f32 %v312, %v994
    %996 = vdwg.mxu0
    %997 = vrot.lane.b32.xlu0 %v302, 120
    %v998 = vpop.permute.xlu0 %997
    %999 = vrot.lane.b32.xlu0 %v302, 88
    %v1000 = vpop.permute.xlu0 %999
    %v1001 = vsel %vm318, %v998, 0
    %v1003 = vsel %vm318, %v1000, 0
    %1005 = vmatpush.xpose.msra.mxu0 0.0
    %1006 = vmatpush.xpose.msra.mxu0 0.0
    %1007 = vmatpush.xpose.msra.mxu0 0.0
    %1008 = vmatpush.xpose.msra.mxu0 0.0
    %1009 = vmatpush.xpose.msra.mxu0 0.0
    %1010 = vmatpush.xpose.msra.mxu0 0.0
    %1011 = vmatpush.xpose.msra.mxu0 0.0
    %1012 = vmatpush.xpose.msra.mxu0 0.0
    %1013 = vmatpush.xpose.msra.mxu0 0.0
    %1014 = vmatpush.xpose.msra.mxu0 0.0
    %1015 = vmatpush.xpose.msra.mxu0 0.0
    %1016 = vmatpush.xpose.msra.mxu0 0.0
    %1017 = vmatpush.xpose.msra.mxu0 0.0
    %1018 = vmatpush.xpose.msra.mxu0 0.0
    %1019 = vmatpush.xpose.msra.mxu0 0.0
    %1020 = vmatpush.xpose.msra.mxu0 %v1003
    %1021 = vmatmul.f32.gmra.mxu0 %v1001
    %v1022 = vpop.f32.mrf.mxu0
    %v1023 = vadd.f32 %v313, %v1022
    %1024 = vdwg.mxu0
    %1025 = vrot.lane.b32.xlu0 %v305, 120
    %v1026 = vpop.permute.xlu0 %1025
    %1027 = vrot.lane.b32.xlu0 %v305, 88
    %v1028 = vpop.permute.xlu0 %1027
    %v1029 = vsel %vm318, %v1026, 0
    %v1031 = vsel %vm318, %v1028, 0
    %1033 = vmatpush.xpose.msra.mxu0 0.0
    %1034 = vmatpush.xpose.msra.mxu0 0.0
    %1035 = vmatpush.xpose.msra.mxu0 0.0
    %1036 = vmatpush.xpose.msra.mxu0 0.0
    %1037 = vmatpush.xpose.msra.mxu0 0.0
    %1038 = vmatpush.xpose.msra.mxu0 0.0
    %1039 = vmatpush.xpose.msra.mxu0 0.0
    %1040 = vmatpush.xpose.msra.mxu0 0.0
    %1041 = vmatpush.xpose.msra.mxu0 0.0
    %1042 = vmatpush.xpose.msra.mxu0 0.0
    %1043 = vmatpush.xpose.msra.mxu0 0.0
    %1044 = vmatpush.xpose.msra.mxu0 0.0
    %1045 = vmatpush.xpose.msra.mxu0 0.0
    %1046 = vmatpush.xpose.msra.mxu0 0.0
    %1047 = vmatpush.xpose.msra.mxu0 0.0
    %1048 = vmatpush.xpose.msra.mxu0 %v1031
    %1049 = vmatmul.f32.gmra.mxu0 %v1029
    %v1050 = vpop.f32.mrf.mxu0
    %v1051 = vadd.f32 %v314, %v1050
    %1052 = vdwg.mxu0
    %v1053 = vsel %vm532, %v855, -inf
    %1054 = vmax.xlane.f32.xlu0 %v1053
    %v1055 = vpop.xlane.xlu0 %1054
    %v1056 = vsel %vm532, %v883, -inf
    %1057 = vmax.xlane.f32.xlu0 %v1056
    %v1058 = vpop.xlane.xlu0 %1057
    %v1059 = vsel %vm532, %v911, -inf
    %1060 = vmax.xlane.f32.xlu0 %v1059
    %v1061 = vpop.xlane.xlu0 %1060
    %v1062 = vsel %vm532, %v939, -inf
    %1063 = vmax.xlane.f32.xlu0 %v1062
    %v1064 = vpop.xlane.xlu0 %1063
    %v1065 = vsel %vm532, %v967, -inf
    %1066 = vmax.xlane.f32.xlu0 %v1065
    %v1067 = vpop.xlane.xlu0 %1066
    %v1068 = vsel %vm532, %v995, -inf
    %1069 = vmax.xlane.f32.xlu0 %v1068
    %v1070 = vpop.xlane.xlu0 %1069
    %v1071 = vsel %vm532, %v1023, -inf
    %1072 = vmax.xlane.f32.xlu0 %v1071
    %v1073 = vpop.xlane.xlu0 %1072
    %v1074 = vsel %vm532, %v1051, -inf
    %1075 = vmax.xlane.f32.xlu0 %v1074
    %v1076 = vpop.xlane.xlu0 %1075
    %v1077 = vsub.f32 %v855, %v1055
    %v1078 = vsub.f32 %v883, %v1058
    %v1079 = vsub.f32 %v911, %v1061
    %v1080 = vsub.f32 %v939, %v1064
    %v1081 = vsub.f32 %v967, %v1067
    %v1082 = vsub.f32 %v995, %v1070
    %v1083 = vsub.f32 %v1023, %v1073
    %v1084 = vsub.f32 %v1051, %v1076
    %v1085 = vmul.f32 %v1077, 1.442695
    %v1086 = vpow.pop %v1085
    %v1087 = vmul.f32 %v1078, 1.442695
    %v1088 = vpow.pop %v1087
    %v1089 = vmul.f32 %v1079, 1.442695
    %v1090 = vpow.pop %v1089
    %v1091 = vmul.f32 %v1080, 1.442695
    %v1092 = vpow.pop %v1091
    %v1093 = vmul.f32 %v1081, 1.442695
    %v1094 = vpow.pop %v1093
    %v1095 = vmul.f32 %v1082, 1.442695
    %v1096 = vpow.pop %v1095
    %v1097 = vmul.f32 %v1083, 1.442695
    %v1098 = vpow.pop %v1097
    %v1099 = vmul.f32 %v1084, 1.442695
    %v1100 = vpow.pop %v1099
    %v1101 = vsel %vm532, %v1086, 0.0
    %1102 = vadd.xlane.f32.xlu0 %v1101
    %v1103 = vpop.xlane.xlu0 %1102
    %v1104 = vsel %vm532, %v1088, 0.0
    %1105 = vadd.xlane.f32.xlu0 %v1104
    %v1106 = vpop.xlane.xlu0 %1105
    %v1107 = vsel %vm532, %v1090, 0.0
    %1108 = vadd.xlane.f32.xlu0 %v1107
    %v1109 = vpop.xlane.xlu0 %1108
    %v1110 = vsel %vm532, %v1092, 0.0
    %1111 = vadd.xlane.f32.xlu0 %v1110
    %v1112 = vpop.xlane.xlu0 %1111
    %v1113 = vsel %vm532, %v1094, 0.0
    %1114 = vadd.xlane.f32.xlu0 %v1113
    %v1115 = vpop.xlane.xlu0 %1114
    %v1116 = vsel %vm532, %v1096, 0.0
    %1117 = vadd.xlane.f32.xlu0 %v1116
    %v1118 = vpop.xlane.xlu0 %1117
    %v1119 = vsel %vm532, %v1098, 0.0
    %1120 = vadd.xlane.f32.xlu0 %v1119
    %v1121 = vpop.xlane.xlu0 %1120
    %v1122 = vsel %vm532, %v1100, 0.0
    %1123 = vadd.xlane.f32.xlu0 %v1122
    %v1124 = vpop.xlane.xlu0 %1123
    %v1125 = vrcp.pop %v1103
    %v1126 = vrcp.pop %v1106
    %v1127 = vrcp.pop %v1109
    %v1128 = vrcp.pop %v1112
    %v1129 = vrcp.pop %v1115
    %v1130 = vrcp.pop %v1118
    %v1131 = vrcp.pop %v1121
    %v1132 = vrcp.pop %v1124
    %v1133 = vmul.f32 %v1086, %v1125
    %v1134 = vmul.f32 %v1088, %v1126
    %v1135 = vmul.f32 %v1090, %v1127
    %v1136 = vmul.f32 %v1092, %v1128
    %v1137 = vmul.f32 %v1094, %v1129
    %v1138 = vmul.f32 %v1096, %v1130
    %v1139 = vmul.f32 %v1098, %v1131
    %v1140 = vmul.f32 %v1100, %v1132
    %1141 = vrot.lane.b32.xlu0 %v284, 56
    %v1142 = vpop.permute.xlu0 %1141
    %v1145 = vsel %vm318, %v1133, 0
    %1147 = vmatpush.msra.mxu0 0.0
    %1148 = vmatpush.msra.mxu0 0.0
    %1149 = vmatpush.msra.mxu0 0.0
    %1150 = vmatpush.msra.mxu0 0.0
    %1151 = vmatpush.msra.mxu0 0.0
    %1152 = vmatpush.msra.mxu0 0.0
    %1153 = vmatpush.msra.mxu0 0.0
    %1154 = vmatpush.msra.mxu0 0.0
    %1155 = vmatpush.msra.mxu0 0.0
    %1156 = vmatpush.msra.mxu0 0.0
    %1157 = vmatpush.msra.mxu0 0.0
    %1158 = vmatpush.msra.mxu0 0.0
    %1159 = vmatpush.msra.mxu0 0.0
    %1160 = vmatpush.msra.mxu0 0.0
    %1161 = vmatpush.msra.mxu0 0.0
    %1162 = vmatpush.msra.mxu0 %v1142
    %1163 = vmatmul.f32.gmra.mxu0 %v1145
    %v1164 = vpop.f32.mrf.mxu0
    %v1165 = vadd.f32 0.0, %v1164
    %1166 = vdwg.mxu0
    %1167 = vrot.lane.b32.xlu0 %v287, 56
    %v1168 = vpop.permute.xlu0 %1167
    %v1171 = vsel %vm318, %v1134, 0
    %1173 = vmatpush.msra.mxu0 0.0
    %1174 = vmatpush.msra.mxu0 0.0
    %1175 = vmatpush.msra.mxu0 0.0
    %1176 = vmatpush.msra.mxu0 0.0
    %1177 = vmatpush.msra.mxu0 0.0
    %1178 = vmatpush.msra.mxu0 0.0
    %1179 = vmatpush.msra.mxu0 0.0
    %1180 = vmatpush.msra.mxu0 0.0
    %1181 = vmatpush.msra.mxu0 0.0
    %1182 = vmatpush.msra.mxu0 0.0
    %1183 = vmatpush.msra.mxu0 0.0
    %1184 = vmatpush.msra.mxu0 0.0
    %1185 = vmatpush.msra.mxu0 0.0
    %1186 = vmatpush.msra.mxu0 0.0
    %1187 = vmatpush.msra.mxu0 0.0
    %1188 = vmatpush.msra.mxu0 %v1168
    %1189 = vmatmul.f32.gmra.mxu0 %v1171
    %v1190 = vpop.f32.mrf.mxu0
    %v1191 = vadd.f32 0.0, %v1190
    %1192 = vdwg.mxu0
    %1193 = vrot.lane.b32.xlu0 %v290, 56
    %v1194 = vpop.permute.xlu0 %1193
    %v1197 = vsel %vm318, %v1135, 0
    %1199 = vmatpush.msra.mxu0 0.0
    %1200 = vmatpush.msra.mxu0 0.0
    %1201 = vmatpush.msra.mxu0 0.0
    %1202 = vmatpush.msra.mxu0 0.0
    %1203 = vmatpush.msra.mxu0 0.0
    %1204 = vmatpush.msra.mxu0 0.0
    %1205 = vmatpush.msra.mxu0 0.0
    %1206 = vmatpush.msra.mxu0 0.0
    %1207 = vmatpush.msra.mxu0 0.0
    %1208 = vmatpush.msra.mxu0 0.0
    %1209 = vmatpush.msra.mxu0 0.0
    %1210 = vmatpush.msra.mxu0 0.0
    %1211 = vmatpush.msra.mxu0 0.0
    %1212 = vmatpush.msra.mxu0 0.0
    %1213 = vmatpush.msra.mxu0 0.0
    %1214 = vmatpush.msra.mxu0 %v1194
    %1215 = vmatmul.f32.gmra.mxu0 %v1197
    %v1216 = vpop.f32.mrf.mxu0
    %v1217 = vadd.f32 0.0, %v1216
    %1218 = vdwg.mxu0
    %1219 = vrot.lane.b32.xlu0 %v293, 56
    %v1220 = vpop.permute.xlu0 %1219
    %v1223 = vsel %vm318, %v1136, 0
    %1225 = vmatpush.msra.mxu0 0.0
    %1226 = vmatpush.msra.mxu0 0.0
    %1227 = vmatpush.msra.mxu0 0.0
    %1228 = vmatpush.msra.mxu0 0.0
    %1229 = vmatpush.msra.mxu0 0.0
    %1230 = vmatpush.msra.mxu0 0.0
    %1231 = vmatpush.msra.mxu0 0.0
    %1232 = vmatpush.msra.mxu0 0.0
    %1233 = vmatpush.msra.mxu0 0.0
    %1234 = vmatpush.msra.mxu0 0.0
    %1235 = vmatpush.msra.mxu0 0.0
    %1236 = vmatpush.msra.mxu0 0.0
    %1237 = vmatpush.msra.mxu0 0.0
    %1238 = vmatpush.msra.mxu0 0.0
    %1239 = vmatpush.msra.mxu0 0.0
    %1240 = vmatpush.msra.mxu0 %v1220
    %1241 = vmatmul.f32.gmra.mxu0 %v1223
    %v1242 = vpop.f32.mrf.mxu0
    %v1243 = vadd.f32 0.0, %v1242
    %1244 = vdwg.mxu0
    %1245 = vrot.lane.b32.xlu0 %v296, 56
    %v1246 = vpop.permute.xlu0 %1245
    %v1249 = vsel %vm318, %v1137, 0
    %1251 = vmatpush.msra.mxu0 0.0
    %1252 = vmatpush.msra.mxu0 0.0
    %1253 = vmatpush.msra.mxu0 0.0
    %1254 = vmatpush.msra.mxu0 0.0
    %1255 = vmatpush.msra.mxu0 0.0
    %1256 = vmatpush.msra.mxu0 0.0
    %1257 = vmatpush.msra.mxu0 0.0
    %1258 = vmatpush.msra.mxu0 0.0
    %1259 = vmatpush.msra.mxu0 0.0
    %1260 = vmatpush.msra.mxu0 0.0
    %1261 = vmatpush.msra.mxu0 0.0
    %1262 = vmatpush.msra.mxu0 0.0
    %1263 = vmatpush.msra.mxu0 0.0
    %1264 = vmatpush.msra.mxu0 0.0
    %1265 = vmatpush.msra.mxu0 0.0
    %1266 = vmatpush.msra.mxu0 %v1246
    %1267 = vmatmul.f32.gmra.mxu0 %v1249
    %v1268 = vpop.f32.mrf.mxu0
    %v1269 = vadd.f32 0.0, %v1268
    %1270 = vdwg.mxu0
    %1271 = vrot.lane.b32.xlu0 %v299, 56
    %v1272 = vpop.permute.xlu0 %1271
    %v1275 = vsel %vm318, %v1138, 0
    %1277 = vmatpush.msra.mxu0 0.0
    %1278 = vmatpush.msra.mxu0 0.0
    %1279 = vmatpush.msra.mxu0 0.0
    %1280 = vmatpush.msra.mxu0 0.0
    %1281 = vmatpush.msra.mxu0 0.0
    %1282 = vmatpush.msra.mxu0 0.0
    %1283 = vmatpush.msra.mxu0 0.0
    %1284 = vmatpush.msra.mxu0 0.0
    %1285 = vmatpush.msra.mxu0 0.0
    %1286 = vmatpush.msra.mxu0 0.0
    %1287 = vmatpush.msra.mxu0 0.0
    %1288 = vmatpush.msra.mxu0 0.0
    %1289 = vmatpush.msra.mxu0 0.0
    %1290 = vmatpush.msra.mxu0 0.0
    %1291 = vmatpush.msra.mxu0 0.0
    %1292 = vmatpush.msra.mxu0 %v1272
    %1293 = vmatmul.f32.gmra.mxu0 %v1275
    %v1294 = vpop.f32.mrf.mxu0
    %v1295 = vadd.f32 0.0, %v1294
    %1296 = vdwg.mxu0
    %1297 = vrot.lane.b32.xlu0 %v302, 56
    %v1298 = vpop.permute.xlu0 %1297
    %v1301 = vsel %vm318, %v1139, 0
    %1303 = vmatpush.msra.mxu0 0.0
    %1304 = vmatpush.msra.mxu0 0.0
    %1305 = vmatpush.msra.mxu0 0.0
    %1306 = vmatpush.msra.mxu0 0.0
    %1307 = vmatpush.msra.mxu0 0.0
    %1308 = vmatpush.msra.mxu0 0.0
    %1309 = vmatpush.msra.mxu0 0.0
    %1310 = vmatpush.msra.mxu0 0.0
    %1311 = vmatpush.msra.mxu0 0.0
    %1312 = vmatpush.msra.mxu0 0.0
    %1313 = vmatpush.msra.mxu0 0.0
    %1314 = vmatpush.msra.mxu0 0.0
    %1315 = vmatpush.msra.mxu0 0.0
    %1316 = vmatpush.msra.mxu0 0.0
    %1317 = vmatpush.msra.mxu0 0.0
    %1318 = vmatpush.msra.mxu0 %v1298
    %1319 = vmatmul.f32.gmra.mxu0 %v1301
    %v1320 = vpop.f32.mrf.mxu0
    %v1321 = vadd.f32 0.0, %v1320
    %1322 = vdwg.mxu0
    %1323 = vrot.lane.b32.xlu0 %v305, 56
    %v1324 = vpop.permute.xlu0 %1323
    %v1327 = vsel %vm318, %v1140, 0
    %1329 = vmatpush.msra.mxu0 0.0
    %1330 = vmatpush.msra.mxu0 0.0
    %1331 = vmatpush.msra.mxu0 0.0
    %1332 = vmatpush.msra.mxu0 0.0
    %1333 = vmatpush.msra.mxu0 0.0
    %1334 = vmatpush.msra.mxu0 0.0
    %1335 = vmatpush.msra.mxu0 0.0
    %1336 = vmatpush.msra.mxu0 0.0
    %1337 = vmatpush.msra.mxu0 0.0
    %1338 = vmatpush.msra.mxu0 0.0
    %1339 = vmatpush.msra.mxu0 0.0
    %1340 = vmatpush.msra.mxu0 0.0
    %1341 = vmatpush.msra.mxu0 0.0
    %1342 = vmatpush.msra.mxu0 0.0
    %1343 = vmatpush.msra.mxu0 0.0
    %1344 = vmatpush.msra.mxu0 %v1324
    %1345 = vmatmul.f32.gmra.mxu0 %v1327
    %v1346 = vpop.f32.mrf.mxu0
    %v1347 = vadd.f32 0.0, %v1346
    %1348 = vdwg.mxu0
    %1349 = vrot.lane.b32.xlu0 %v284, 112
    %v1350 = vpop.permute.xlu0 %1349
    %1351 = vrot.lane.b32.xlu0 %v284, 80
    %v1352 = vpop.permute.xlu0 %1351
    %v1353 = vsel %vm318, %v1350, 0
    %v1355 = vsel %vm318, %v1352, 0
    %1357 = vmatpush.xpose.msra.mxu0 0.0
    %1358 = vmatpush.xpose.msra.mxu0 0.0
    %1359 = vmatpush.xpose.msra.mxu0 0.0
    %1360 = vmatpush.xpose.msra.mxu0 0.0
    %1361 = vmatpush.xpose.msra.mxu0 0.0
    %1362 = vmatpush.xpose.msra.mxu0 0.0
    %1363 = vmatpush.xpose.msra.mxu0 0.0
    %1364 = vmatpush.xpose.msra.mxu0 0.0
    %1365 = vmatpush.xpose.msra.mxu0 0.0
    %1366 = vmatpush.xpose.msra.mxu0 0.0
    %1367 = vmatpush.xpose.msra.mxu0 0.0
    %1368 = vmatpush.xpose.msra.mxu0 0.0
    %1369 = vmatpush.xpose.msra.mxu0 0.0
    %1370 = vmatpush.xpose.msra.mxu0 0.0
    %1371 = vmatpush.xpose.msra.mxu0 0.0
    %1372 = vmatpush.xpose.msra.mxu0 %v1355
    %1373 = vmatmul.f32.gmra.mxu0 %v1353
    %v1374 = vpop.f32.mrf.mxu0
    %v1375 = vadd.f32 %v307, %v1374
    %1376 = vdwg.mxu0
    %1377 = vrot.lane.b32.xlu0 %v287, 112
    %v1378 = vpop.permute.xlu0 %1377
    %1379 = vrot.lane.b32.xlu0 %v287, 80
    %v1380 = vpop.permute.xlu0 %1379
    %v1381 = vsel %vm318, %v1378, 0
    %v1383 = vsel %vm318, %v1380, 0
    %1385 = vmatpush.xpose.msra.mxu0 0.0
    %1386 = vmatpush.xpose.msra.mxu0 0.0
    %1387 = vmatpush.xpose.msra.mxu0 0.0
    %1388 = vmatpush.xpose.msra.mxu0 0.0
    %1389 = vmatpush.xpose.msra.mxu0 0.0
    %1390 = vmatpush.xpose.msra.mxu0 0.0
    %1391 = vmatpush.xpose.msra.mxu0 0.0
    %1392 = vmatpush.xpose.msra.mxu0 0.0
    %1393 = vmatpush.xpose.msra.mxu0 0.0
    %1394 = vmatpush.xpose.msra.mxu0 0.0
    %1395 = vmatpush.xpose.msra.mxu0 0.0
    %1396 = vmatpush.xpose.msra.mxu0 0.0
    %1397 = vmatpush.xpose.msra.mxu0 0.0
    %1398 = vmatpush.xpose.msra.mxu0 0.0
    %1399 = vmatpush.xpose.msra.mxu0 0.0
    %1400 = vmatpush.xpose.msra.mxu0 %v1383
    %1401 = vmatmul.f32.gmra.mxu0 %v1381
    %v1402 = vpop.f32.mrf.mxu0
    %v1403 = vadd.f32 %v308, %v1402
    %1404 = vdwg.mxu0
    %1405 = vrot.lane.b32.xlu0 %v290, 112
    %v1406 = vpop.permute.xlu0 %1405
    %1407 = vrot.lane.b32.xlu0 %v290, 80
    %v1408 = vpop.permute.xlu0 %1407
    %v1409 = vsel %vm318, %v1406, 0
    %v1411 = vsel %vm318, %v1408, 0
    %1413 = vmatpush.xpose.msra.mxu0 0.0
    %1414 = vmatpush.xpose.msra.mxu0 0.0
    %1415 = vmatpush.xpose.msra.mxu0 0.0
    %1416 = vmatpush.xpose.msra.mxu0 0.0
    %1417 = vmatpush.xpose.msra.mxu0 0.0
    %1418 = vmatpush.xpose.msra.mxu0 0.0
    %1419 = vmatpush.xpose.msra.mxu0 0.0
    %1420 = vmatpush.xpose.msra.mxu0 0.0
    %1421 = vmatpush.xpose.msra.mxu0 0.0
    %1422 = vmatpush.xpose.msra.mxu0 0.0
    %1423 = vmatpush.xpose.msra.mxu0 0.0
    %1424 = vmatpush.xpose.msra.mxu0 0.0
    %1425 = vmatpush.xpose.msra.mxu0 0.0
    %1426 = vmatpush.xpose.msra.mxu0 0.0
    %1427 = vmatpush.xpose.msra.mxu0 0.0
    %1428 = vmatpush.xpose.msra.mxu0 %v1411
    %1429 = vmatmul.f32.gmra.mxu0 %v1409
    %v1430 = vpop.f32.mrf.mxu0
    %v1431 = vadd.f32 %v309, %v1430
    %1432 = vdwg.mxu0
    %1433 = vrot.lane.b32.xlu0 %v293, 112
    %v1434 = vpop.permute.xlu0 %1433
    %1435 = vrot.lane.b32.xlu0 %v293, 80
    %v1436 = vpop.permute.xlu0 %1435
    %v1437 = vsel %vm318, %v1434, 0
    %v1439 = vsel %vm318, %v1436, 0
    %1441 = vmatpush.xpose.msra.mxu0 0.0
    %1442 = vmatpush.xpose.msra.mxu0 0.0
    %1443 = vmatpush.xpose.msra.mxu0 0.0
    %1444 = vmatpush.xpose.msra.mxu0 0.0
    %1445 = vmatpush.xpose.msra.mxu0 0.0
    %1446 = vmatpush.xpose.msra.mxu0 0.0
    %1447 = vmatpush.xpose.msra.mxu0 0.0
    %1448 = vmatpush.xpose.msra.mxu0 0.0
    %1449 = vmatpush.xpose.msra.mxu0 0.0
    %1450 = vmatpush.xpose.msra.mxu0 0.0
    %1451 = vmatpush.xpose.msra.mxu0 0.0
    %1452 = vmatpush.xpose.msra.mxu0 0.0
    %1453 = vmatpush.xpose.msra.mxu0 0.0
    %1454 = vmatpush.xpose.msra.mxu0 0.0
    %1455 = vmatpush.xpose.msra.mxu0 0.0
    %1456 = vmatpush.xpose.msra.mxu0 %v1439
    %1457 = vmatmul.f32.gmra.mxu0 %v1437
    %v1458 = vpop.f32.mrf.mxu0
    %v1459 = vadd.f32 %v310, %v1458
    %1460 = vdwg.mxu0
    %1461 = vrot.lane.b32.xlu0 %v296, 112
    %v1462 = vpop.permute.xlu0 %1461
    %1463 = vrot.lane.b32.xlu0 %v296, 80
    %v1464 = vpop.permute.xlu0 %1463
    %v1465 = vsel %vm318, %v1462, 0
    %v1467 = vsel %vm318, %v1464, 0
    %1469 = vmatpush.xpose.msra.mxu0 0.0
    %1470 = vmatpush.xpose.msra.mxu0 0.0
    %1471 = vmatpush.xpose.msra.mxu0 0.0
    %1472 = vmatpush.xpose.msra.mxu0 0.0
    %1473 = vmatpush.xpose.msra.mxu0 0.0
    %1474 = vmatpush.xpose.msra.mxu0 0.0
    %1475 = vmatpush.xpose.msra.mxu0 0.0
    %1476 = vmatpush.xpose.msra.mxu0 0.0
    %1477 = vmatpush.xpose.msra.mxu0 0.0
    %1478 = vmatpush.xpose.msra.mxu0 0.0
    %1479 = vmatpush.xpose.msra.mxu0 0.0
    %1480 = vmatpush.xpose.msra.mxu0 0.0
    %1481 = vmatpush.xpose.msra.mxu0 0.0
    %1482 = vmatpush.xpose.msra.mxu0 0.0
    %1483 = vmatpush.xpose.msra.mxu0 0.0
    %1484 = vmatpush.xpose.msra.mxu0 %v1467
    %1485 = vmatmul.f32.gmra.mxu0 %v1465
    %v1486 = vpop.f32.mrf.mxu0
    %v1487 = vadd.f32 %v311, %v1486
    %1488 = vdwg.mxu0
    %1489 = vrot.lane.b32.xlu0 %v299, 112
    %v1490 = vpop.permute.xlu0 %1489
    %1491 = vrot.lane.b32.xlu0 %v299, 80
    %v1492 = vpop.permute.xlu0 %1491
    %v1493 = vsel %vm318, %v1490, 0
    %v1495 = vsel %vm318, %v1492, 0
    %1497 = vmatpush.xpose.msra.mxu0 0.0
    %1498 = vmatpush.xpose.msra.mxu0 0.0
    %1499 = vmatpush.xpose.msra.mxu0 0.0
    %1500 = vmatpush.xpose.msra.mxu0 0.0
    %1501 = vmatpush.xpose.msra.mxu0 0.0
    %1502 = vmatpush.xpose.msra.mxu0 0.0
    %1503 = vmatpush.xpose.msra.mxu0 0.0
    %1504 = vmatpush.xpose.msra.mxu0 0.0
    %1505 = vmatpush.xpose.msra.mxu0 0.0
    %1506 = vmatpush.xpose.msra.mxu0 0.0
    %1507 = vmatpush.xpose.msra.mxu0 0.0
    %1508 = vmatpush.xpose.msra.mxu0 0.0
    %1509 = vmatpush.xpose.msra.mxu0 0.0
    %1510 = vmatpush.xpose.msra.mxu0 0.0
    %1511 = vmatpush.xpose.msra.mxu0 0.0
    %1512 = vmatpush.xpose.msra.mxu0 %v1495
    %1513 = vmatmul.f32.gmra.mxu0 %v1493
    %v1514 = vpop.f32.mrf.mxu0
    %v1515 = vadd.f32 %v312, %v1514
    %1516 = vdwg.mxu0
    %1517 = vrot.lane.b32.xlu0 %v302, 112
    %v1518 = vpop.permute.xlu0 %1517
    %1519 = vrot.lane.b32.xlu0 %v302, 80
    %v1520 = vpop.permute.xlu0 %1519
    %v1521 = vsel %vm318, %v1518, 0
    %v1523 = vsel %vm318, %v1520, 0
    %1525 = vmatpush.xpose.msra.mxu0 0.0
    %1526 = vmatpush.xpose.msra.mxu0 0.0
    %1527 = vmatpush.xpose.msra.mxu0 0.0
    %1528 = vmatpush.xpose.msra.mxu0 0.0
    %1529 = vmatpush.xpose.msra.mxu0 0.0
    %1530 = vmatpush.xpose.msra.mxu0 0.0
    %1531 = vmatpush.xpose.msra.mxu0 0.0
    %1532 = vmatpush.xpose.msra.mxu0 0.0
    %1533 = vmatpush.xpose.msra.mxu0 0.0
    %1534 = vmatpush.xpose.msra.mxu0 0.0
    %1535 = vmatpush.xpose.msra.mxu0 0.0
    %1536 = vmatpush.xpose.msra.mxu0 0.0
    %1537 = vmatpush.xpose.msra.mxu0 0.0
    %1538 = vmatpush.xpose.msra.mxu0 0.0
    %1539 = vmatpush.xpose.msra.mxu0 0.0
    %1540 = vmatpush.xpose.msra.mxu0 %v1523
    %1541 = vmatmul.f32.gmra.mxu0 %v1521
    %v1542 = vpop.f32.mrf.mxu0
    %v1543 = vadd.f32 %v313, %v1542
    %1544 = vdwg.mxu0
    %1545 = vrot.lane.b32.xlu0 %v305, 112
    %v1546 = vpop.permute.xlu0 %1545
    %1547 = vrot.lane.b32.xlu0 %v305, 80
    %v1548 = vpop.permute.xlu0 %1547
    %v1549 = vsel %vm318, %v1546, 0
    %v1551 = vsel %vm318, %v1548, 0
    %1553 = vmatpush.xpose.msra.mxu0 0.0
    %1554 = vmatpush.xpose.msra.mxu0 0.0
    %1555 = vmatpush.xpose.msra.mxu0 0.0
    %1556 = vmatpush.xpose.msra.mxu0 0.0
    %1557 = vmatpush.xpose.msra.mxu0 0.0
    %1558 = vmatpush.xpose.msra.mxu0 0.0
    %1559 = vmatpush.xpose.msra.mxu0 0.0
    %1560 = vmatpush.xpose.msra.mxu0 0.0
    %1561 = vmatpush.xpose.msra.mxu0 0.0
    %1562 = vmatpush.xpose.msra.mxu0 0.0
    %1563 = vmatpush.xpose.msra.mxu0 0.0
    %1564 = vmatpush.xpose.msra.mxu0 0.0
    %1565 = vmatpush.xpose.msra.mxu0 0.0
    %1566 = vmatpush.xpose.msra.mxu0 0.0
    %1567 = vmatpush.xpose.msra.mxu0 0.0
    %1568 = vmatpush.xpose.msra.mxu0 %v1551
    %1569 = vmatmul.f32.gmra.mxu0 %v1549
    %v1570 = vpop.f32.mrf.mxu0
    %v1571 = vadd.f32 %v314, %v1570
    %1572 = vdwg.mxu0
    %v1573 = vsel %vm532, %v1375, -inf
    %1574 = vmax.xlane.f32.xlu0 %v1573
    %v1575 = vpop.xlane.xlu0 %1574
    %v1576 = vsel %vm532, %v1403, -inf
    %1577 = vmax.xlane.f32.xlu0 %v1576
    %v1578 = vpop.xlane.xlu0 %1577
    %v1579 = vsel %vm532, %v1431, -inf
    %1580 = vmax.xlane.f32.xlu0 %v1579
    %v1581 = vpop.xlane.xlu0 %1580
    %v1582 = vsel %vm532, %v1459, -inf
    %1583 = vmax.xlane.f32.xlu0 %v1582
    %v1584 = vpop.xlane.xlu0 %1583
    %v1585 = vsel %vm532, %v1487, -inf
    %1586 = vmax.xlane.f32.xlu0 %v1585
    %v1587 = vpop.xlane.xlu0 %1586
    %v1588 = vsel %vm532, %v1515, -inf
    %1589 = vmax.xlane.f32.xlu0 %v1588
    %v1590 = vpop.xlane.xlu0 %1589
    %v1591 = vsel %vm532, %v1543, -inf
    %1592 = vmax.xlane.f32.xlu0 %v1591
    %v1593 = vpop.xlane.xlu0 %1592
    %v1594 = vsel %vm532, %v1571, -inf
    %1595 = vmax.xlane.f32.xlu0 %v1594
    %v1596 = vpop.xlane.xlu0 %1595
    %v1597 = vsub.f32 %v1375, %v1575
    %v1598 = vsub.f32 %v1403, %v1578
    %v1599 = vsub.f32 %v1431, %v1581
    %v1600 = vsub.f32 %v1459, %v1584
    %v1601 = vsub.f32 %v1487, %v1587
    %v1602 = vsub.f32 %v1515, %v1590
    %v1603 = vsub.f32 %v1543, %v1593
    %v1604 = vsub.f32 %v1571, %v1596
    %v1605 = vmul.f32 %v1597, 1.442695
    %v1606 = vpow.pop %v1605
    %v1607 = vmul.f32 %v1598, 1.442695
    %v1608 = vpow.pop %v1607
    %v1609 = vmul.f32 %v1599, 1.442695
    %v1610 = vpow.pop %v1609
    %v1611 = vmul.f32 %v1600, 1.442695
    %v1612 = vpow.pop %v1611
    %v1613 = vmul.f32 %v1601, 1.442695
    %v1614 = vpow.pop %v1613
    %v1615 = vmul.f32 %v1602, 1.442695
    %v1616 = vpow.pop %v1615
    %v1617 = vmul.f32 %v1603, 1.442695
    %v1618 = vpow.pop %v1617
    %v1619 = vmul.f32 %v1604, 1.442695
    %v1620 = vpow.pop %v1619
    %v1621 = vsel %vm532, %v1606, 0.0
    %1622 = vadd.xlane.f32.xlu0 %v1621
    %v1623 = vpop.xlane.xlu0 %1622
    %v1624 = vsel %vm532, %v1608, 0.0
    %1625 = vadd.xlane.f32.xlu0 %v1624
    %v1626 = vpop.xlane.xlu0 %1625
    %v1627 = vsel %vm532, %v1610, 0.0
    %1628 = vadd.xlane.f32.xlu0 %v1627
    %v1629 = vpop.xlane.xlu0 %1628
    %v1630 = vsel %vm532, %v1612, 0.0
    %1631 = vadd.xlane.f32.xlu0 %v1630
    %v1632 = vpop.xlane.xlu0 %1631
    %v1633 = vsel %vm532, %v1614, 0.0
    %1634 = vadd.xlane.f32.xlu0 %v1633
    %v1635 = vpop.xlane.xlu0 %1634
    %v1636 = vsel %vm532, %v1616, 0.0
    %1637 = vadd.xlane.f32.xlu0 %v1636
    %v1638 = vpop.xlane.xlu0 %1637
    %v1639 = vsel %vm532, %v1618, 0.0
    %1640 = vadd.xlane.f32.xlu0 %v1639
    %v1641 = vpop.xlane.xlu0 %1640
    %v1642 = vsel %vm532, %v1620, 0.0
    %1643 = vadd.xlane.f32.xlu0 %v1642
    %v1644 = vpop.xlane.xlu0 %1643
    %v1645 = vrcp.pop %v1623
    %v1646 = vrcp.pop %v1626
    %v1647 = vrcp.pop %v1629
    %v1648 = vrcp.pop %v1632
    %v1649 = vrcp.pop %v1635
    %v1650 = vrcp.pop %v1638
    %v1651 = vrcp.pop %v1641
    %v1652 = vrcp.pop %v1644
    %v1653 = vmul.f32 %v1606, %v1645
    %v1654 = vmul.f32 %v1608, %v1646
    %v1655 = vmul.f32 %v1610, %v1647
    %v1656 = vmul.f32 %v1612, %v1648
    %v1657 = vmul.f32 %v1614, %v1649
    %v1658 = vmul.f32 %v1616, %v1650
    %v1659 = vmul.f32 %v1618, %v1651
    %v1660 = vmul.f32 %v1620, %v1652
    %1661 = vrot.lane.b32.xlu0 %v284, 48
    %v1662 = vpop.permute.xlu0 %1661
    %v1665 = vsel %vm318, %v1653, 0
    %1667 = vmatpush.msra.mxu0 0.0
    %1668 = vmatpush.msra.mxu0 0.0
    %1669 = vmatpush.msra.mxu0 0.0
    %1670 = vmatpush.msra.mxu0 0.0
    %1671 = vmatpush.msra.mxu0 0.0
    %1672 = vmatpush.msra.mxu0 0.0
    %1673 = vmatpush.msra.mxu0 0.0
    %1674 = vmatpush.msra.mxu0 0.0
    %1675 = vmatpush.msra.mxu0 0.0
    %1676 = vmatpush.msra.mxu0 0.0
    %1677 = vmatpush.msra.mxu0 0.0
    %1678 = vmatpush.msra.mxu0 0.0
    %1679 = vmatpush.msra.mxu0 0.0
    %1680 = vmatpush.msra.mxu0 0.0
    %1681 = vmatpush.msra.mxu0 0.0
    %1682 = vmatpush.msra.mxu0 %v1662
    %1683 = vmatmul.f32.gmra.mxu0 %v1665
    %v1684 = vpop.f32.mrf.mxu0
    %v1685 = vadd.f32 0.0, %v1684
    %1686 = vdwg.mxu0
    %1687 = vrot.lane.b32.xlu0 %v287, 48
    %v1688 = vpop.permute.xlu0 %1687
    %v1691 = vsel %vm318, %v1654, 0
    %1693 = vmatpush.msra.mxu0 0.0
    %1694 = vmatpush.msra.mxu0 0.0
    %1695 = vmatpush.msra.mxu0 0.0
    %1696 = vmatpush.msra.mxu0 0.0
    %1697 = vmatpush.msra.mxu0 0.0
    %1698 = vmatpush.msra.mxu0 0.0
    %1699 = vmatpush.msra.mxu0 0.0
    %1700 = vmatpush.msra.mxu0 0.0
    %1701 = vmatpush.msra.mxu0 0.0
    %1702 = vmatpush.msra.mxu0 0.0
    %1703 = vmatpush.msra.mxu0 0.0
    %1704 = vmatpush.msra.mxu0 0.0
    %1705 = vmatpush.msra.mxu0 0.0
    %1706 = vmatpush.msra.mxu0 0.0
    %1707 = vmatpush.msra.mxu0 0.0
    %1708 = vmatpush.msra.mxu0 %v1688
    %1709 = vmatmul.f32.gmra.mxu0 %v1691
    %v1710 = vpop.f32.mrf.mxu0
    %v1711 = vadd.f32 0.0, %v1710
    %1712 = vdwg.mxu0
    %1713 = vrot.lane.b32.xlu0 %v290, 48
    %v1714 = vpop.permute.xlu0 %1713
    %v1717 = vsel %vm318, %v1655, 0
    %1719 = vmatpush.msra.mxu0 0.0
    %1720 = vmatpush.msra.mxu0 0.0
    %1721 = vmatpush.msra.mxu0 0.0
    %1722 = vmatpush.msra.mxu0 0.0
    %1723 = vmatpush.msra.mxu0 0.0
    %1724 = vmatpush.msra.mxu0 0.0
    %1725 = vmatpush.msra.mxu0 0.0
    %1726 = vmatpush.msra.mxu0 0.0
    %1727 = vmatpush.msra.mxu0 0.0
    %1728 = vmatpush.msra.mxu0 0.0
    %1729 = vmatpush.msra.mxu0 0.0
    %1730 = vmatpush.msra.mxu0 0.0
    %1731 = vmatpush.msra.mxu0 0.0
    %1732 = vmatpush.msra.mxu0 0.0
    %1733 = vmatpush.msra.mxu0 0.0
    %1734 = vmatpush.msra.mxu0 %v1714
    %1735 = vmatmul.f32.gmra.mxu0 %v1717
    %v1736 = vpop.f32.mrf.mxu0
    %v1737 = vadd.f32 0.0, %v1736
    %1738 = vdwg.mxu0
    %1739 = vrot.lane.b32.xlu0 %v293, 48
    %v1740 = vpop.permute.xlu0 %1739
    %v1743 = vsel %vm318, %v1656, 0
    %1745 = vmatpush.msra.mxu0 0.0
    %1746 = vmatpush.msra.mxu0 0.0
    %1747 = vmatpush.msra.mxu0 0.0
    %1748 = vmatpush.msra.mxu0 0.0
    %1749 = vmatpush.msra.mxu0 0.0
    %1750 = vmatpush.msra.mxu0 0.0
    %1751 = vmatpush.msra.mxu0 0.0
    %1752 = vmatpush.msra.mxu0 0.0
    %1753 = vmatpush.msra.mxu0 0.0
    %1754 = vmatpush.msra.mxu0 0.0
    %1755 = vmatpush.msra.mxu0 0.0
    %1756 = vmatpush.msra.mxu0 0.0
    %1757 = vmatpush.msra.mxu0 0.0
    %1758 = vmatpush.msra.mxu0 0.0
    %1759 = vmatpush.msra.mxu0 0.0
    %1760 = vmatpush.msra.mxu0 %v1740
    %1761 = vmatmul.f32.gmra.mxu0 %v1743
    %v1762 = vpop.f32.mrf.mxu0
    %v1763 = vadd.f32 0.0, %v1762
    %1764 = vdwg.mxu0
    %1765 = vrot.lane.b32.xlu0 %v296, 48
    %v1766 = vpop.permute.xlu0 %1765
    %v1769 = vsel %vm318, %v1657, 0
    %1771 = vmatpush.msra.mxu0 0.0
    %1772 = vmatpush.msra.mxu0 0.0
    %1773 = vmatpush.msra.mxu0 0.0
    %1774 = vmatpush.msra.mxu0 0.0
    %1775 = vmatpush.msra.mxu0 0.0
    %1776 = vmatpush.msra.mxu0 0.0
    %1777 = vmatpush.msra.mxu0 0.0
    %1778 = vmatpush.msra.mxu0 0.0
    %1779 = vmatpush.msra.mxu0 0.0
    %1780 = vmatpush.msra.mxu0 0.0
    %1781 = vmatpush.msra.mxu0 0.0
    %1782 = vmatpush.msra.mxu0 0.0
    %1783 = vmatpush.msra.mxu0 0.0
    %1784 = vmatpush.msra.mxu0 0.0
    %1785 = vmatpush.msra.mxu0 0.0
    %1786 = vmatpush.msra.mxu0 %v1766
    %1787 = vmatmul.f32.gmra.mxu0 %v1769
    %v1788 = vpop.f32.mrf.mxu0
    %v1789 = vadd.f32 0.0, %v1788
    %1790 = vdwg.mxu0
    %1791 = vrot.lane.b32.xlu0 %v299, 48
    %v1792 = vpop.permute.xlu0 %1791
    %v1795 = vsel %vm318, %v1658, 0
    %1797 = vmatpush.msra.mxu0 0.0
    %1798 = vmatpush.msra.mxu0 0.0
    %1799 = vmatpush.msra.mxu0 0.0
    %1800 = vmatpush.msra.mxu0 0.0
    %1801 = vmatpush.msra.mxu0 0.0
    %1802 = vmatpush.msra.mxu0 0.0
    %1803 = vmatpush.msra.mxu0 0.0
    %1804 = vmatpush.msra.mxu0 0.0
    %1805 = vmatpush.msra.mxu0 0.0
    %1806 = vmatpush.msra.mxu0 0.0
    %1807 = vmatpush.msra.mxu0 0.0
    %1808 = vmatpush.msra.mxu0 0.0
    %1809 = vmatpush.msra.mxu0 0.0
    %1810 = vmatpush.msra.mxu0 0.0
    %1811 = vmatpush.msra.mxu0 0.0
    %1812 = vmatpush.msra.mxu0 %v1792
    %1813 = vmatmul.f32.gmra.mxu0 %v1795
    %v1814 = vpop.f32.mrf.mxu0
    %v1815 = vadd.f32 0.0, %v1814
    %1816 = vdwg.mxu0
    %1817 = vrot.lane.b32.xlu0 %v302, 48
    %v1818 = vpop.permute.xlu0 %1817
    %v1821 = vsel %vm318, %v1659, 0
    %1823 = vmatpush.msra.mxu0 0.0
    %1824 = vmatpush.msra.mxu0 0.0
    %1825 = vmatpush.msra.mxu0 0.0
    %1826 = vmatpush.msra.mxu0 0.0
    %1827 = vmatpush.msra.mxu0 0.0
    %1828 = vmatpush.msra.mxu0 0.0
    %1829 = vmatpush.msra.mxu0 0.0
    %1830 = vmatpush.msra.mxu0 0.0
    %1831 = vmatpush.msra.mxu0 0.0
    %1832 = vmatpush.msra.mxu0 0.0
    %1833 = vmatpush.msra.mxu0 0.0
    %1834 = vmatpush.msra.mxu0 0.0
    %1835 = vmatpush.msra.mxu0 0.0
    %1836 = vmatpush.msra.mxu0 0.0
    %1837 = vmatpush.msra.mxu0 0.0
    %1838 = vmatpush.msra.mxu0 %v1818
    %1839 = vmatmul.f32.gmra.mxu0 %v1821
    %v1840 = vpop.f32.mrf.mxu0
    %v1841 = vadd.f32 0.0, %v1840
    %1842 = vdwg.mxu0
    %1843 = vrot.lane.b32.xlu0 %v305, 48
    %v1844 = vpop.permute.xlu0 %1843
    %v1847 = vsel %vm318, %v1660, 0
    %1849 = vmatpush.msra.mxu0 0.0
    %1850 = vmatpush.msra.mxu0 0.0
    %1851 = vmatpush.msra.mxu0 0.0
    %1852 = vmatpush.msra.mxu0 0.0
    %1853 = vmatpush.msra.mxu0 0.0
    %1854 = vmatpush.msra.mxu0 0.0
    %1855 = vmatpush.msra.mxu0 0.0
    %1856 = vmatpush.msra.mxu0 0.0
    %1857 = vmatpush.msra.mxu0 0.0
    %1858 = vmatpush.msra.mxu0 0.0
    %1859 = vmatpush.msra.mxu0 0.0
    %1860 = vmatpush.msra.mxu0 0.0
    %1861 = vmatpush.msra.mxu0 0.0
    %1862 = vmatpush.msra.mxu0 0.0
    %1863 = vmatpush.msra.mxu0 0.0
    %1864 = vmatpush.msra.mxu0 %v1844
    %1865 = vmatmul.f32.gmra.mxu0 %v1847
    %v1866 = vpop.f32.mrf.mxu0
    %v1867 = vadd.f32 0.0, %v1866
    %1868 = vdwg.mxu0
    %1869 = vrot.lane.b32.xlu0 %v284, 104
    %v1870 = vpop.permute.xlu0 %1869
    %1871 = vrot.lane.b32.xlu0 %v284, 72
    %v1872 = vpop.permute.xlu0 %1871
    %v1873 = vsel %vm318, %v1870, 0
    %v1875 = vsel %vm318, %v1872, 0
    %1877 = vmatpush.xpose.msra.mxu0 0.0
    %1878 = vmatpush.xpose.msra.mxu0 0.0
    %1879 = vmatpush.xpose.msra.mxu0 0.0
    %1880 = vmatpush.xpose.msra.mxu0 0.0
    %1881 = vmatpush.xpose.msra.mxu0 0.0
    %1882 = vmatpush.xpose.msra.mxu0 0.0
    %1883 = vmatpush.xpose.msra.mxu0 0.0
    %1884 = vmatpush.xpose.msra.mxu0 0.0
    %1885 = vmatpush.xpose.msra.mxu0 0.0
    %1886 = vmatpush.xpose.msra.mxu0 0.0
    %1887 = vmatpush.xpose.msra.mxu0 0.0
    %1888 = vmatpush.xpose.msra.mxu0 0.0
    %1889 = vmatpush.xpose.msra.mxu0 0.0
    %1890 = vmatpush.xpose.msra.mxu0 0.0
    %1891 = vmatpush.xpose.msra.mxu0 0.0
    %1892 = vmatpush.xpose.msra.mxu0 %v1875
    %1893 = vmatmul.f32.gmra.mxu0 %v1873
    %v1894 = vpop.f32.mrf.mxu0
    %v1895 = vadd.f32 %v307, %v1894
    %1896 = vdwg.mxu0
    %1897 = vrot.lane.b32.xlu0 %v287, 104
    %v1898 = vpop.permute.xlu0 %1897
    %1899 = vrot.lane.b32.xlu0 %v287, 72
    %v1900 = vpop.permute.xlu0 %1899
    %v1901 = vsel %vm318, %v1898, 0
    %v1903 = vsel %vm318, %v1900, 0
    %1905 = vmatpush.xpose.msra.mxu0 0.0
    %1906 = vmatpush.xpose.msra.mxu0 0.0
    %1907 = vmatpush.xpose.msra.mxu0 0.0
    %1908 = vmatpush.xpose.msra.mxu0 0.0
    %1909 = vmatpush.xpose.msra.mxu0 0.0
    %1910 = vmatpush.xpose.msra.mxu0 0.0
    %1911 = vmatpush.xpose.msra.mxu0 0.0
    %1912 = vmatpush.xpose.msra.mxu0 0.0
    %1913 = vmatpush.xpose.msra.mxu0 0.0
    %1914 = vmatpush.xpose.msra.mxu0 0.0
    %1915 = vmatpush.xpose.msra.mxu0 0.0
    %1916 = vmatpush.xpose.msra.mxu0 0.0
    %1917 = vmatpush.xpose.msra.mxu0 0.0
    %1918 = vmatpush.xpose.msra.mxu0 0.0
    %1919 = vmatpush.xpose.msra.mxu0 0.0
    %1920 = vmatpush.xpose.msra.mxu0 %v1903
    %1921 = vmatmul.f32.gmra.mxu0 %v1901
    %v1922 = vpop.f32.mrf.mxu0
    %v1923 = vadd.f32 %v308, %v1922
    %1924 = vdwg.mxu0
    %1925 = vrot.lane.b32.xlu0 %v290, 104
    %v1926 = vpop.permute.xlu0 %1925
    %1927 = vrot.lane.b32.xlu0 %v290, 72
    %v1928 = vpop.permute.xlu0 %1927
    %v1929 = vsel %vm318, %v1926, 0
    %v1931 = vsel %vm318, %v1928, 0
    %1933 = vmatpush.xpose.msra.mxu0 0.0
    %1934 = vmatpush.xpose.msra.mxu0 0.0
    %1935 = vmatpush.xpose.msra.mxu0 0.0
    %1936 = vmatpush.xpose.msra.mxu0 0.0
    %1937 = vmatpush.xpose.msra.mxu0 0.0
    %1938 = vmatpush.xpose.msra.mxu0 0.0
    %1939 = vmatpush.xpose.msra.mxu0 0.0
    %1940 = vmatpush.xpose.msra.mxu0 0.0
    %1941 = vmatpush.xpose.msra.mxu0 0.0
    %1942 = vmatpush.xpose.msra.mxu0 0.0
    %1943 = vmatpush.xpose.msra.mxu0 0.0
    %1944 = vmatpush.xpose.msra.mxu0 0.0
    %1945 = vmatpush.xpose.msra.mxu0 0.0
    %1946 = vmatpush.xpose.msra.mxu0 0.0
    %1947 = vmatpush.xpose.msra.mxu0 0.0
    %1948 = vmatpush.xpose.msra.mxu0 %v1931
    %1949 = vmatmul.f32.gmra.mxu0 %v1929
    %v1950 = vpop.f32.mrf.mxu0
    %v1951 = vadd.f32 %v309, %v1950
    %1952 = vdwg.mxu0
    %1953 = vrot.lane.b32.xlu0 %v293, 104
    %v1954 = vpop.permute.xlu0 %1953
    %1955 = vrot.lane.b32.xlu0 %v293, 72
    %v1956 = vpop.permute.xlu0 %1955
    %v1957 = vsel %vm318, %v1954, 0
    %v1959 = vsel %vm318, %v1956, 0
    %1961 = vmatpush.xpose.msra.mxu0 0.0
    %1962 = vmatpush.xpose.msra.mxu0 0.0
    %1963 = vmatpush.xpose.msra.mxu0 0.0
    %1964 = vmatpush.xpose.msra.mxu0 0.0
    %1965 = vmatpush.xpose.msra.mxu0 0.0
    %1966 = vmatpush.xpose.msra.mxu0 0.0
    %1967 = vmatpush.xpose.msra.mxu0 0.0
    %1968 = vmatpush.xpose.msra.mxu0 0.0
    %1969 = vmatpush.xpose.msra.mxu0 0.0
    %1970 = vmatpush.xpose.msra.mxu0 0.0
    %1971 = vmatpush.xpose.msra.mxu0 0.0
    %1972 = vmatpush.xpose.msra.mxu0 0.0
    %1973 = vmatpush.xpose.msra.mxu0 0.0
    %1974 = vmatpush.xpose.msra.mxu0 0.0
    %1975 = vmatpush.xpose.msra.mxu0 0.0
    %1976 = vmatpush.xpose.msra.mxu0 %v1959
    %1977 = vmatmul.f32.gmra.mxu0 %v1957
    %v1978 = vpop.f32.mrf.mxu0
    %v1979 = vadd.f32 %v310, %v1978
    %1980 = vdwg.mxu0
    %1981 = vrot.lane.b32.xlu0 %v296, 104
    %v1982 = vpop.permute.xlu0 %1981
    %1983 = vrot.lane.b32.xlu0 %v296, 72
    %v1984 = vpop.permute.xlu0 %1983
    %v1985 = vsel %vm318, %v1982, 0
    %v1987 = vsel %vm318, %v1984, 0
    %1989 = vmatpush.xpose.msra.mxu0 0.0
    %1990 = vmatpush.xpose.msra.mxu0 0.0
    %1991 = vmatpush.xpose.msra.mxu0 0.0
    %1992 = vmatpush.xpose.msra.mxu0 0.0
    %1993 = vmatpush.xpose.msra.mxu0 0.0
    %1994 = vmatpush.xpose.msra.mxu0 0.0
    %1995 = vmatpush.xpose.msra.mxu0 0.0
    %1996 = vmatpush.xpose.msra.mxu0 0.0
    %1997 = vmatpush.xpose.msra.mxu0 0.0
    %1998 = vmatpush.xpose.msra.mxu0 0.0
    %1999 = vmatpush.xpose.msra.mxu0 0.0
    %2000 = vmatpush.xpose.msra.mxu0 0.0
    %2001 = vmatpush.xpose.msra.mxu0 0.0
    %2002 = vmatpush.xpose.msra.mxu0 0.0
    %2003 = vmatpush.xpose.msra.mxu0 0.0
    %2004 = vmatpush.xpose.msra.mxu0 %v1987
    %2005 = vmatmul.f32.gmra.mxu0 %v1985
    %v2006 = vpop.f32.mrf.mxu0
    %v2007 = vadd.f32 %v311, %v2006
    %2008 = vdwg.mxu0
    %2009 = vrot.lane.b32.xlu0 %v299, 104
    %v2010 = vpop.permute.xlu0 %2009
    %2011 = vrot.lane.b32.xlu0 %v299, 72
    %v2012 = vpop.permute.xlu0 %2011
    %v2013 = vsel %vm318, %v2010, 0
    %v2015 = vsel %vm318, %v2012, 0
    %2017 = vmatpush.xpose.msra.mxu0 0.0
    %2018 = vmatpush.xpose.msra.mxu0 0.0
    %2019 = vmatpush.xpose.msra.mxu0 0.0
    %2020 = vmatpush.xpose.msra.mxu0 0.0
    %2021 = vmatpush.xpose.msra.mxu0 0.0
    %2022 = vmatpush.xpose.msra.mxu0 0.0
    %2023 = vmatpush.xpose.msra.mxu0 0.0
    %2024 = vmatpush.xpose.msra.mxu0 0.0
    %2025 = vmatpush.xpose.msra.mxu0 0.0
    %2026 = vmatpush.xpose.msra.mxu0 0.0
    %2027 = vmatpush.xpose.msra.mxu0 0.0
    %2028 = vmatpush.xpose.msra.mxu0 0.0
    %2029 = vmatpush.xpose.msra.mxu0 0.0
    %2030 = vmatpush.xpose.msra.mxu0 0.0
    %2031 = vmatpush.xpose.msra.mxu0 0.0
    %2032 = vmatpush.xpose.msra.mxu0 %v2015
    %2033 = vmatmul.f32.gmra.mxu0 %v2013
    %v2034 = vpop.f32.mrf.mxu0
    %v2035 = vadd.f32 %v312, %v2034
    %2036 = vdwg.mxu0
    %2037 = vrot.lane.b32.xlu0 %v302, 104
    %v2038 = vpop.permute.xlu0 %2037
    %2039 = vrot.lane.b32.xlu0 %v302, 72
    %v2040 = vpop.permute.xlu0 %2039
    %v2041 = vsel %vm318, %v2038, 0
    %v2043 = vsel %vm318, %v2040, 0
    %2045 = vmatpush.xpose.msra.mxu0 0.0
    %2046 = vmatpush.xpose.msra.mxu0 0.0
    %2047 = vmatpush.xpose.msra.mxu0 0.0
    %2048 = vmatpush.xpose.msra.mxu0 0.0
    %2049 = vmatpush.xpose.msra.mxu0 0.0
    %2050 = vmatpush.xpose.msra.mxu0 0.0
    %2051 = vmatpush.xpose.msra.mxu0 0.0
    %2052 = vmatpush.xpose.msra.mxu0 0.0
    %2053 = vmatpush.xpose.msra.mxu0 0.0
    %2054 = vmatpush.xpose.msra.mxu0 0.0
    %2055 = vmatpush.xpose.msra.mxu0 0.0
    %2056 = vmatpush.xpose.msra.mxu0 0.0
    %2057 = vmatpush.xpose.msra.mxu0 0.0
    %2058 = vmatpush.xpose.msra.mxu0 0.0
    %2059 = vmatpush.xpose.msra.mxu0 0.0
    %2060 = vmatpush.xpose.msra.mxu0 %v2043
    %2061 = vmatmul.f32.gmra.mxu0 %v2041
    %v2062 = vpop.f32.mrf.mxu0
    %v2063 = vadd.f32 %v313, %v2062
    %2064 = vdwg.mxu0
    %2065 = vrot.lane.b32.xlu0 %v305, 104
    %v2066 = vpop.permute.xlu0 %2065
    %2067 = vrot.lane.b32.xlu0 %v305, 72
    %v2068 = vpop.permute.xlu0 %2067
    %v2069 = vsel %vm318, %v2066, 0
    %v2071 = vsel %vm318, %v2068, 0
    %2073 = vmatpush.xpose.msra.mxu0 0.0
    %2074 = vmatpush.xpose.msra.mxu0 0.0
    %2075 = vmatpush.xpose.msra.mxu0 0.0
    %2076 = vmatpush.xpose.msra.mxu0 0.0
    %2077 = vmatpush.xpose.msra.mxu0 0.0
    %2078 = vmatpush.xpose.msra.mxu0 0.0
    %2079 = vmatpush.xpose.msra.mxu0 0.0
    %2080 = vmatpush.xpose.msra.mxu0 0.0
    %2081 = vmatpush.xpose.msra.mxu0 0.0
    %2082 = vmatpush.xpose.msra.mxu0 0.0
    %2083 = vmatpush.xpose.msra.mxu0 0.0
    %2084 = vmatpush.xpose.msra.mxu0 0.0
    %2085 = vmatpush.xpose.msra.mxu0 0.0
    %2086 = vmatpush.xpose.msra.mxu0 0.0
    %2087 = vmatpush.xpose.msra.mxu0 0.0
    %2088 = vmatpush.xpose.msra.mxu0 %v2071
    %2089 = vmatmul.f32.gmra.mxu0 %v2069
    %v2090 = vpop.f32.mrf.mxu0
    %v2091 = vadd.f32 %v314, %v2090
    %2092 = vdwg.mxu0
    %v2093 = vsel %vm532, %v1895, -inf
    %2094 = vmax.xlane.f32.xlu0 %v2093
    %v2095 = vpop.xlane.xlu0 %2094
    %v2096 = vsel %vm532, %v1923, -inf
    %2097 = vmax.xlane.f32.xlu0 %v2096
    %v2098 = vpop.xlane.xlu0 %2097
    %v2099 = vsel %vm532, %v1951, -inf
    %2100 = vmax.xlane.f32.xlu0 %v2099
    %v2101 = vpop.xlane.xlu0 %2100
    %v2102 = vsel %vm532, %v1979, -inf
    %2103 = vmax.xlane.f32.xlu0 %v2102
    %v2104 = vpop.xlane.xlu0 %2103
    %v2105 = vsel %vm532, %v2007, -inf
    %2106 = vmax.xlane.f32.xlu0 %v2105
    %v2107 = vpop.xlane.xlu0 %2106
    %v2108 = vsel %vm532, %v2035, -inf
    %2109 = vmax.xlane.f32.xlu0 %v2108
    %v2110 = vpop.xlane.xlu0 %2109
    %v2111 = vsel %vm532, %v2063, -inf
    %2112 = vmax.xlane.f32.xlu0 %v2111
    %v2113 = vpop.xlane.xlu0 %2112
    %v2114 = vsel %vm532, %v2091, -inf
    %2115 = vmax.xlane.f32.xlu0 %v2114
    %v2116 = vpop.xlane.xlu0 %2115
    %v2117 = vsub.f32 %v1895, %v2095
    %v2118 = vsub.f32 %v1923, %v2098
    %v2119 = vsub.f32 %v1951, %v2101
    %v2120 = vsub.f32 %v1979, %v2104
    %v2121 = vsub.f32 %v2007, %v2107
    %v2122 = vsub.f32 %v2035, %v2110
    %v2123 = vsub.f32 %v2063, %v2113
    %v2124 = vsub.f32 %v2091, %v2116
    %v2125 = vmul.f32 %v2117, 1.442695
    %v2126 = vpow.pop %v2125
    %v2127 = vmul.f32 %v2118, 1.442695
    %v2128 = vpow.pop %v2127
    %v2129 = vmul.f32 %v2119, 1.442695
    %v2130 = vpow.pop %v2129
    %v2131 = vmul.f32 %v2120, 1.442695
    %v2132 = vpow.pop %v2131
    %v2133 = vmul.f32 %v2121, 1.442695
    %v2134 = vpow.pop %v2133
    %v2135 = vmul.f32 %v2122, 1.442695
    %v2136 = vpow.pop %v2135
    %v2137 = vmul.f32 %v2123, 1.442695
    %v2138 = vpow.pop %v2137
    %v2139 = vmul.f32 %v2124, 1.442695
    %v2140 = vpow.pop %v2139
    %v2141 = vsel %vm532, %v2126, 0.0
    %2142 = vadd.xlane.f32.xlu0 %v2141
    %v2143 = vpop.xlane.xlu0 %2142
    %v2144 = vsel %vm532, %v2128, 0.0
    %2145 = vadd.xlane.f32.xlu0 %v2144
    %v2146 = vpop.xlane.xlu0 %2145
    %v2147 = vsel %vm532, %v2130, 0.0
    %2148 = vadd.xlane.f32.xlu0 %v2147
    %v2149 = vpop.xlane.xlu0 %2148
    %v2150 = vsel %vm532, %v2132, 0.0
    %2151 = vadd.xlane.f32.xlu0 %v2150
    %v2152 = vpop.xlane.xlu0 %2151
    %v2153 = vsel %vm532, %v2134, 0.0
    %2154 = vadd.xlane.f32.xlu0 %v2153
    %v2155 = vpop.xlane.xlu0 %2154
    %v2156 = vsel %vm532, %v2136, 0.0
    %2157 = vadd.xlane.f32.xlu0 %v2156
    %v2158 = vpop.xlane.xlu0 %2157
    %v2159 = vsel %vm532, %v2138, 0.0
    %2160 = vadd.xlane.f32.xlu0 %v2159
    %v2161 = vpop.xlane.xlu0 %2160
    %v2162 = vsel %vm532, %v2140, 0.0
    %2163 = vadd.xlane.f32.xlu0 %v2162
    %v2164 = vpop.xlane.xlu0 %2163
    %v2165 = vrcp.pop %v2143
    %v2166 = vrcp.pop %v2146
    %v2167 = vrcp.pop %v2149
    %v2168 = vrcp.pop %v2152
    %v2169 = vrcp.pop %v2155
    %v2170 = vrcp.pop %v2158
    %v2171 = vrcp.pop %v2161
    %v2172 = vrcp.pop %v2164
    %v2173 = vmul.f32 %v2126, %v2165
    %v2174 = vmul.f32 %v2128, %v2166
    %v2175 = vmul.f32 %v2130, %v2167
    %v2176 = vmul.f32 %v2132, %v2168
    %v2177 = vmul.f32 %v2134, %v2169
    %v2178 = vmul.f32 %v2136, %v2170
    %v2179 = vmul.f32 %v2138, %v2171
    %v2180 = vmul.f32 %v2140, %v2172
    %2181 = vrot.lane.b32.xlu0 %v284, 40
    %v2182 = vpop.permute.xlu0 %2181
    %v2185 = vsel %vm318, %v2173, 0
    %2187 = vmatpush.msra.mxu0 0.0
    %2188 = vmatpush.msra.mxu0 0.0
    %2189 = vmatpush.msra.mxu0 0.0
    %2190 = vmatpush.msra.mxu0 0.0
    %2191 = vmatpush.msra.mxu0 0.0
    %2192 = vmatpush.msra.mxu0 0.0
    %2193 = vmatpush.msra.mxu0 0.0
    %2194 = vmatpush.msra.mxu0 0.0
    %2195 = vmatpush.msra.mxu0 0.0
    %2196 = vmatpush.msra.mxu0 0.0
    %2197 = vmatpush.msra.mxu0 0.0
    %2198 = vmatpush.msra.mxu0 0.0
    %2199 = vmatpush.msra.mxu0 0.0
    %2200 = vmatpush.msra.mxu0 0.0
    %2201 = vmatpush.msra.mxu0 0.0
    %2202 = vmatpush.msra.mxu0 %v2182
    %2203 = vmatmul.f32.gmra.mxu0 %v2185
    %v2204 = vpop.f32.mrf.mxu0
    %v2205 = vadd.f32 0.0, %v2204
    %2206 = vdwg.mxu0
    %2207 = vrot.lane.b32.xlu0 %v287, 40
    %v2208 = vpop.permute.xlu0 %2207
    %v2211 = vsel %vm318, %v2174, 0
    %2213 = vmatpush.msra.mxu0 0.0
    %2214 = vmatpush.msra.mxu0 0.0
    %2215 = vmatpush.msra.mxu0 0.0
    %2216 = vmatpush.msra.mxu0 0.0
    %2217 = vmatpush.msra.mxu0 0.0
    %2218 = vmatpush.msra.mxu0 0.0
    %2219 = vmatpush.msra.mxu0 0.0
    %2220 = vmatpush.msra.mxu0 0.0
    %2221 = vmatpush.msra.mxu0 0.0
    %2222 = vmatpush.msra.mxu0 0.0
    %2223 = vmatpush.msra.mxu0 0.0
    %2224 = vmatpush.msra.mxu0 0.0
    %2225 = vmatpush.msra.mxu0 0.0
    %2226 = vmatpush.msra.mxu0 0.0
    %2227 = vmatpush.msra.mxu0 0.0
    %2228 = vmatpush.msra.mxu0 %v2208
    %2229 = vmatmul.f32.gmra.mxu0 %v2211
    %v2230 = vpop.f32.mrf.mxu0
    %v2231 = vadd.f32 0.0, %v2230
    %2232 = vdwg.mxu0
    %2233 = vrot.lane.b32.xlu0 %v290, 40
    %v2234 = vpop.permute.xlu0 %2233
    %v2237 = vsel %vm318, %v2175, 0
    %2239 = vmatpush.msra.mxu0 0.0
    %2240 = vmatpush.msra.mxu0 0.0
    %2241 = vmatpush.msra.mxu0 0.0
    %2242 = vmatpush.msra.mxu0 0.0
    %2243 = vmatpush.msra.mxu0 0.0
    %2244 = vmatpush.msra.mxu0 0.0
    %2245 = vmatpush.msra.mxu0 0.0
    %2246 = vmatpush.msra.mxu0 0.0
    %2247 = vmatpush.msra.mxu0 0.0
    %2248 = vmatpush.msra.mxu0 0.0
    %2249 = vmatpush.msra.mxu0 0.0
    %2250 = vmatpush.msra.mxu0 0.0
    %2251 = vmatpush.msra.mxu0 0.0
    %2252 = vmatpush.msra.mxu0 0.0
    %2253 = vmatpush.msra.mxu0 0.0
    %2254 = vmatpush.msra.mxu0 %v2234
    %2255 = vmatmul.f32.gmra.mxu0 %v2237
    %v2256 = vpop.f32.mrf.mxu0
    %v2257 = vadd.f32 0.0, %v2256
    %2258 = vdwg.mxu0
    %2259 = vrot.lane.b32.xlu0 %v293, 40
    %v2260 = vpop.permute.xlu0 %2259
    %v2263 = vsel %vm318, %v2176, 0
    %2265 = vmatpush.msra.mxu0 0.0
    %2266 = vmatpush.msra.mxu0 0.0
    %2267 = vmatpush.msra.mxu0 0.0
    %2268 = vmatpush.msra.mxu0 0.0
    %2269 = vmatpush.msra.mxu0 0.0
    %2270 = vmatpush.msra.mxu0 0.0
    %2271 = vmatpush.msra.mxu0 0.0
    %2272 = vmatpush.msra.mxu0 0.0
    %2273 = vmatpush.msra.mxu0 0.0
    %2274 = vmatpush.msra.mxu0 0.0
    %2275 = vmatpush.msra.mxu0 0.0
    %2276 = vmatpush.msra.mxu0 0.0
    %2277 = vmatpush.msra.mxu0 0.0
    %2278 = vmatpush.msra.mxu0 0.0
    %2279 = vmatpush.msra.mxu0 0.0
    %2280 = vmatpush.msra.mxu0 %v2260
    %2281 = vmatmul.f32.gmra.mxu0 %v2263
    %v2282 = vpop.f32.mrf.mxu0
    %v2283 = vadd.f32 0.0, %v2282
    %2284 = vdwg.mxu0
    %2285 = vrot.lane.b32.xlu0 %v296, 40
    %v2286 = vpop.permute.xlu0 %2285
    %v2289 = vsel %vm318, %v2177, 0
    %2291 = vmatpush.msra.mxu0 0.0
    %2292 = vmatpush.msra.mxu0 0.0
    %2293 = vmatpush.msra.mxu0 0.0
    %2294 = vmatpush.msra.mxu0 0.0
    %2295 = vmatpush.msra.mxu0 0.0
    %2296 = vmatpush.msra.mxu0 0.0
    %2297 = vmatpush.msra.mxu0 0.0
    %2298 = vmatpush.msra.mxu0 0.0
    %2299 = vmatpush.msra.mxu0 0.0
    %2300 = vmatpush.msra.mxu0 0.0
    %2301 = vmatpush.msra.mxu0 0.0
    %2302 = vmatpush.msra.mxu0 0.0
    %2303 = vmatpush.msra.mxu0 0.0
    %2304 = vmatpush.msra.mxu0 0.0
    %2305 = vmatpush.msra.mxu0 0.0
    %2306 = vmatpush.msra.mxu0 %v2286
    %2307 = vmatmul.f32.gmra.mxu0 %v2289
    %v2308 = vpop.f32.mrf.mxu0
    %v2309 = vadd.f32 0.0, %v2308
    %2310 = vdwg.mxu0
    %2311 = vrot.lane.b32.xlu0 %v299, 40
    %v2312 = vpop.permute.xlu0 %2311
    %v2315 = vsel %vm318, %v2178, 0
    %2317 = vmatpush.msra.mxu0 0.0
    %2318 = vmatpush.msra.mxu0 0.0
    %2319 = vmatpush.msra.mxu0 0.0
    %2320 = vmatpush.msra.mxu0 0.0
    %2321 = vmatpush.msra.mxu0 0.0
    %2322 = vmatpush.msra.mxu0 0.0
    %2323 = vmatpush.msra.mxu0 0.0
    %2324 = vmatpush.msra.mxu0 0.0
    %2325 = vmatpush.msra.mxu0 0.0
    %2326 = vmatpush.msra.mxu0 0.0
    %2327 = vmatpush.msra.mxu0 0.0
    %2328 = vmatpush.msra.mxu0 0.0
    %2329 = vmatpush.msra.mxu0 0.0
    %2330 = vmatpush.msra.mxu0 0.0
    %2331 = vmatpush.msra.mxu0 0.0
    %2332 = vmatpush.msra.mxu0 %v2312
    %2333 = vmatmul.f32.gmra.mxu0 %v2315
    %v2334 = vpop.f32.mrf.mxu0
    %v2335 = vadd.f32 0.0, %v2334
    %2336 = vdwg.mxu0
    %2337 = vrot.lane.b32.xlu0 %v302, 40
    %v2338 = vpop.permute.xlu0 %2337
    %v2341 = vsel %vm318, %v2179, 0
    %2343 = vmatpush.msra.mxu0 0.0
    %2344 = vmatpush.msra.mxu0 0.0
    %2345 = vmatpush.msra.mxu0 0.0
    %2346 = vmatpush.msra.mxu0 0.0
    %2347 = vmatpush.msra.mxu0 0.0
    %2348 = vmatpush.msra.mxu0 0.0
    %2349 = vmatpush.msra.mxu0 0.0
    %2350 = vmatpush.msra.mxu0 0.0
    %2351 = vmatpush.msra.mxu0 0.0
    %2352 = vmatpush.msra.mxu0 0.0
    %2353 = vmatpush.msra.mxu0 0.0
    %2354 = vmatpush.msra.mxu0 0.0
    %2355 = vmatpush.msra.mxu0 0.0
    %2356 = vmatpush.msra.mxu0 0.0
    %2357 = vmatpush.msra.mxu0 0.0
    %2358 = vmatpush.msra.mxu0 %v2338
    %2359 = vmatmul.f32.gmra.mxu0 %v2341
    %v2360 = vpop.f32.mrf.mxu0
    %v2361 = vadd.f32 0.0, %v2360
    %2362 = vdwg.mxu0
    %2363 = vrot.lane.b32.xlu0 %v305, 40
    %v2364 = vpop.permute.xlu0 %2363
    %v2367 = vsel %vm318, %v2180, 0
    %2369 = vmatpush.msra.mxu0 0.0
    %2370 = vmatpush.msra.mxu0 0.0
    %2371 = vmatpush.msra.mxu0 0.0
    %2372 = vmatpush.msra.mxu0 0.0
    %2373 = vmatpush.msra.mxu0 0.0
    %2374 = vmatpush.msra.mxu0 0.0
    %2375 = vmatpush.msra.mxu0 0.0
    %2376 = vmatpush.msra.mxu0 0.0
    %2377 = vmatpush.msra.mxu0 0.0
    %2378 = vmatpush.msra.mxu0 0.0
    %2379 = vmatpush.msra.mxu0 0.0
    %2380 = vmatpush.msra.mxu0 0.0
    %2381 = vmatpush.msra.mxu0 0.0
    %2382 = vmatpush.msra.mxu0 0.0
    %2383 = vmatpush.msra.mxu0 0.0
    %2384 = vmatpush.msra.mxu0 %v2364
    %2385 = vmatmul.f32.gmra.mxu0 %v2367
    %v2386 = vpop.f32.mrf.mxu0
    %v2387 = vadd.f32 0.0, %v2386
    %2388 = vdwg.mxu0
    %2397 = vrot.lane.b32.xlu0 %v1165, 8
    %v2398 = vpop.permute.xlu0 %2397
    %2399 = vrot.lane.b32.xlu0 %v1191, 8
    %v2400 = vpop.permute.xlu0 %2399
    %2401 = vrot.lane.b32.xlu0 %v1217, 8
    %v2402 = vpop.permute.xlu0 %2401
    %2403 = vrot.lane.b32.xlu0 %v1243, 8
    %v2404 = vpop.permute.xlu0 %2403
    %2405 = vrot.lane.b32.xlu0 %v1269, 8
    %v2406 = vpop.permute.xlu0 %2405
    %2407 = vrot.lane.b32.xlu0 %v1295, 8
    %v2408 = vpop.permute.xlu0 %2407
    %2409 = vrot.lane.b32.xlu0 %v1321, 8
    %v2410 = vpop.permute.xlu0 %2409
    %2411 = vrot.lane.b32.xlu0 %v1347, 8
    %v2412 = vpop.permute.xlu0 %2411
    %2429 = vrot.lane.b32.xlu0 %v1685, 16
    %v2430 = vpop.permute.xlu0 %2429
    %2431 = vrot.lane.b32.xlu0 %v1711, 16
    %v2432 = vpop.permute.xlu0 %2431
    %2433 = vrot.lane.b32.xlu0 %v1737, 16
    %v2434 = vpop.permute.xlu0 %2433
    %2435 = vrot.lane.b32.xlu0 %v1763, 16
    %v2436 = vpop.permute.xlu0 %2435
    %2437 = vrot.lane.b32.xlu0 %v1789, 16
    %v2438 = vpop.permute.xlu0 %2437
    %2439 = vrot.lane.b32.xlu0 %v1815, 16
    %v2440 = vpop.permute.xlu0 %2439
    %2441 = vrot.lane.b32.xlu0 %v1841, 16
    %v2442 = vpop.permute.xlu0 %2441
    %2443 = vrot.lane.b32.xlu0 %v1867, 16
    %v2444 = vpop.permute.xlu0 %2443
    %2461 = vrot.lane.b32.xlu0 %v2205, 24
    %v2462 = vpop.permute.xlu0 %2461
    %2463 = vrot.lane.b32.xlu0 %v2231, 24
    %v2464 = vpop.permute.xlu0 %2463
    %2465 = vrot.lane.b32.xlu0 %v2257, 24
    %v2466 = vpop.permute.xlu0 %2465
    %2467 = vrot.lane.b32.xlu0 %v2283, 24
    %v2468 = vpop.permute.xlu0 %2467
    %2469 = vrot.lane.b32.xlu0 %v2309, 24
    %v2470 = vpop.permute.xlu0 %2469
    %2471 = vrot.lane.b32.xlu0 %v2335, 24
    %v2472 = vpop.permute.xlu0 %2471
    %2473 = vrot.lane.b32.xlu0 %v2361, 24
    %v2474 = vpop.permute.xlu0 %2473
    %2475 = vrot.lane.b32.xlu0 %v2387, 24
    %v2476 = vpop.permute.xlu0 %2475
    %v2485 = vsel %vm318, %v645, %v2398
    %v2486 = vsel %vm318, %v671, %v2400
    %v2487 = vsel %vm318, %v697, %v2402
    %v2488 = vsel %vm318, %v723, %v2404
    %v2489 = vsel %vm318, %v749, %v2406
    %v2490 = vsel %vm318, %v775, %v2408
    %v2491 = vsel %vm318, %v801, %v2410
    %v2492 = vsel %vm318, %v827, %v2412
    %vm2493 = vcmask 130048
    %v2494 = vsel %vm2493, %v2485, %v2430
    %v2495 = vsel %vm2493, %v2486, %v2432
    %v2496 = vsel %vm2493, %v2487, %v2434
    %v2497 = vsel %vm2493, %v2488, %v2436
    %v2498 = vsel %vm2493, %v2489, %v2438
    %v2499 = vsel %vm2493, %v2490, %v2440
    %v2500 = vsel %vm2493, %v2491, %v2442
    %v2501 = vsel %vm2493, %v2492, %v2444
    %v2502 = vsel %vm163, %v2494, %v2462
    %v2503 = vsel %vm163, %v2495, %v2464
    %v2504 = vsel %vm163, %v2496, %v2466
    %v2505 = vsel %vm163, %v2497, %v2468
    %v2506 = vsel %vm163, %v2498, %v2470
    %v2507 = vsel %vm163, %v2499, %v2472
    %v2508 = vsel %vm163, %v2500, %v2474
    %v2509 = vsel %vm163, %v2501, %v2476
    %2511 = vset.pattern.permute.xlu0 8
    %2512 = vperm.xlu0 %2511, %v307
    %v2513 = vpop.permute.xlu0 %2512
    %2516 = vset.pattern.permute.xlu0 8
    %2517 = vperm.xlu0 %2516, %v308
    %v2518 = vpop.permute.xlu0 %2517
    %2521 = vset.pattern.permute.xlu0 8
    %2522 = vperm.xlu0 %2521, %v309
    %v2523 = vpop.permute.xlu0 %2522
    %2526 = vset.pattern.permute.xlu0 8
    %2527 = vperm.xlu0 %2526, %v310
    %v2528 = vpop.permute.xlu0 %2527
    %2531 = vset.pattern.permute.xlu0 8
    %2532 = vperm.xlu0 %2531, %v311
    %v2533 = vpop.permute.xlu0 %2532
    %2536 = vset.pattern.permute.xlu0 8
    %2537 = vperm.xlu0 %2536, %v312
    %v2538 = vpop.permute.xlu0 %2537
    %2541 = vset.pattern.permute.xlu0 8
    %2542 = vperm.xlu0 %2541, %v313
    %v2543 = vpop.permute.xlu0 %2542
    %2546 = vset.pattern.permute.xlu0 8
    %2547 = vperm.xlu0 %2546, %v314
    %v2548 = vpop.permute.xlu0 %2547
    %v2550 = vmul.f32 %v2502, %v2513
    %v2551 = vmul.f32 %v2503, %v2518
    %v2552 = vmul.f32 %v2504, %v2523
    %v2553 = vmul.f32 %v2505, %v2528
    %v2554 = vmul.f32 %v2506, %v2533
    %v2555 = vmul.f32 %v2507, %v2538
    %v2556 = vmul.f32 %v2508, %v2543
    %v2557 = vmul.f32 %v2509, %v2548
    %v2558 = vld [vmem:[#allocation10] sm:$0xff]
    %v2559 = vld [vmem:[#allocation10 + $0x8] sm:$0xff]
    %v2560 = vld [vmem:[#allocation10 + $0x10] sm:$0xff]
    %v2561 = vld [vmem:[#allocation10 + $0x18] sm:$0xff]
    %v2562 = vld [vmem:[%s6] sm:$0x1]
    %v2564 = vperm.slane %v2562, 0
    %2574 = vst [vmem:[#allocation1] ss:$2 sm:$0xff] %v2550
    %s2575 = scalar_lea.vmem [#allocation1], 1
    %2576 = vst [vmem:[%s2575] ss:$2 sm:$0xff] %v2551
    %s2577 = scalar_lea.vmem [#allocation1], 16
    %2578 = vst [vmem:[%s2577] ss:$2 sm:$0xff] %v2552
    %s2579 = scalar_lea.vmem [#allocation1], 17
    %2580 = vst [vmem:[%s2579] ss:$2 sm:$0xff] %v2553
    %s2581 = scalar_lea.vmem [#allocation1], 32
    %2582 = vst [vmem:[%s2581] ss:$2 sm:$0xff] %v2554
    %s2583 = scalar_lea.vmem [#allocation1], 33
    %2584 = vst [vmem:[%s2583] ss:$2 sm:$0xff] %v2555
    %s2585 = scalar_lea.vmem [#allocation1], 48
    %2586 = vst [vmem:[%s2585] ss:$2 sm:$0xff] %v2556
    %s2587 = scalar_lea.vmem [#allocation1], 49
    %2588 = vst [vmem:[%s2587] ss:$2 sm:$0xff] %v2557
    %v2589 = vld.sshfl [vmem:[#allocation1] sm:$0xff pattern:$0x75316420]
    %v2590 = vld.sshfl [vmem:[#allocation1 + $0x10] sm:$0xff pattern:$0x75316420]
    %v2591 = vld.sshfl [vmem:[#allocation1 + $0x20] sm:$0xff pattern:$0x75316420]
    %v2592 = vld.sshfl [vmem:[#allocation1 + $0x30] sm:$0xff pattern:$0x75316420]
    %v2593 = vsel %vm241, %v2589, 0
    %v2595 = vsel %vm241, %v2590, 0
    %v2597 = vsel %vm241, %v2591, 0
    %v2599 = vsel %vm241, %v2592, 0
    %2601 = vmatpush.msra.mxu0 0.0
    %2602 = vmatpush.msra.mxu0 0.0
    %2603 = vmatpush.msra.mxu0 0.0
    %2604 = vmatpush.msra.mxu0 0.0
    %2605 = vmatpush.msra.mxu0 0.0
    %2606 = vmatpush.msra.mxu0 0.0
    %2607 = vmatpush.msra.mxu0 0.0
    %2608 = vmatpush.msra.mxu0 0.0
    %2609 = vmatpush.msra.mxu0 0.0
    %2610 = vmatpush.msra.mxu0 0.0
    %2611 = vmatpush.msra.mxu0 0.0
    %2612 = vmatpush.msra.mxu0 0.0
    %2613 = vmatpush.msra.mxu0 %v2561
    %2614 = vmatpush.msra.mxu0 %v2560
    %2615 = vmatpush.msra.mxu0 %v2559
    %2616 = vmatpush.msra.mxu0 %v2558
    %2617 = vmatmul.f32.gmra.mxu0 %v2593
    %v2618 = vpop.f32.mrf.mxu0
    %v2619 = vadd.f32 %v2564, %v2618
    %2620 = vmatmul.f32.gmra.mxu0 %v2595
    %v2621 = vpop.f32.mrf.mxu0
    %v2622 = vadd.f32 %v2564, %v2621
    %2623 = vmatmul.f32.gmra.mxu0 %v2597
    %v2624 = vpop.f32.mrf.mxu0
    %v2625 = vadd.f32 %v2564, %v2624
    %2626 = vmatmul.f32.gmra.mxu0 %v2599
    %v2627 = vpop.f32.mrf.mxu0
    %v2628 = vadd.f32 %v2564, %v2627
    %2629 = vdwg.mxu0
    %v2630 = vmax.f32 %v2619, 0.0
    %v2631 = vmax.f32 %v2622, 0.0
    %v2632 = vmax.f32 %v2625, 0.0
    %v2633 = vmax.f32 %v2628, 0.0
    %2634 = vset.pattern.permute.xlu0 9
    %2635 = vperm.xlu0 %2634, %v307
    %v2636 = vpop.permute.xlu0 %2635
    %v2639 = vunpack.c.l.s4 839922192
    %v2640 = vunpack.c.0.s8 %v2639
    %v2641 = vperm.slane %v2636, %v2640
    %2642 = vset.pattern.permute.xlu0 9
    %2643 = vperm.xlu0 %2642, %v308
    %v2644 = vpop.permute.xlu0 %2643
    %v2647 = vunpack.c.l.s4 839922192
    %v2648 = vunpack.c.0.s8 %v2647
    %v2649 = vperm.slane %v2644, %v2648
    %2650 = vset.pattern.permute.xlu0 9
    %2651 = vperm.xlu0 %2650, %v309
    %v2652 = vpop.permute.xlu0 %2651
    %v2655 = vunpack.c.l.s4 839922192
    %v2656 = vunpack.c.0.s8 %v2655
    %v2657 = vperm.slane %v2652, %v2656
    %2658 = vset.pattern.permute.xlu0 9
    %2659 = vperm.xlu0 %2658, %v310
    %v2660 = vpop.permute.xlu0 %2659
    %v2663 = vunpack.c.l.s4 839922192
    %v2664 = vunpack.c.0.s8 %v2663
    %v2665 = vperm.slane %v2660, %v2664
    %2666 = vset.pattern.permute.xlu0 9
    %2667 = vperm.xlu0 %2666, %v311
    %v2668 = vpop.permute.xlu0 %2667
    %v2671 = vunpack.c.l.s4 839922192
    %v2672 = vunpack.c.0.s8 %v2671
    %v2673 = vperm.slane %v2668, %v2672
    %2674 = vset.pattern.permute.xlu0 9
    %2675 = vperm.xlu0 %2674, %v312
    %v2676 = vpop.permute.xlu0 %2675
    %v2679 = vunpack.c.l.s4 839922192
    %v2680 = vunpack.c.0.s8 %v2679
    %v2681 = vperm.slane %v2676, %v2680
    %2682 = vset.pattern.permute.xlu0 9
    %2683 = vperm.xlu0 %2682, %v313
    %v2684 = vpop.permute.xlu0 %2683
    %v2687 = vunpack.c.l.s4 839922192
    %v2688 = vunpack.c.0.s8 %v2687
    %v2689 = vperm.slane %v2684, %v2688
    %2690 = vset.pattern.permute.xlu0 9
    %2691 = vperm.xlu0 %2690, %v314
    %v2692 = vpop.permute.xlu0 %2691
    %v2695 = vunpack.c.l.s4 839922192
    %v2696 = vunpack.c.0.s8 %v2695
    %v2697 = vperm.slane %v2692, %v2696
    %2706 = vst [vmem:[#allocation1] ss:$2 sm:$0xff] %v2641
    %s2707 = scalar_lea.vmem [#allocation1], 1
    %2708 = vst [vmem:[%s2707] ss:$2 sm:$0xff] %v2649
    %s2709 = scalar_lea.vmem [#allocation1], 16
    %2710 = vst [vmem:[%s2709] ss:$2 sm:$0xff] %v2657
    %s2711 = scalar_lea.vmem [#allocation1], 17
    %2712 = vst [vmem:[%s2711] ss:$2 sm:$0xff] %v2665
    %s2713 = scalar_lea.vmem [#allocation1], 32
    %2714 = vst [vmem:[%s2713] ss:$2 sm:$0xff] %v2673
    %s2715 = scalar_lea.vmem [#allocation1], 33
    %2716 = vst [vmem:[%s2715] ss:$2 sm:$0xff] %v2681
    %s2717 = scalar_lea.vmem [#allocation1], 48
    %2718 = vst [vmem:[%s2717] ss:$2 sm:$0xff] %v2689
    %s2719 = scalar_lea.vmem [#allocation1], 49
    %2720 = vst [vmem:[%s2719] ss:$2 sm:$0xff] %v2697
    %v2721 = vld.sshfl [vmem:[#allocation1] sm:$0xff pattern:$0x75316420]
    %v2722 = vld.sshfl [vmem:[#allocation1 + $0x10] sm:$0xff pattern:$0x75316420]
    %v2723 = vld.sshfl [vmem:[#allocation1 + $0x20] sm:$0xff pattern:$0x75316420]
    %v2724 = vld.sshfl [vmem:[#allocation1 + $0x30] sm:$0xff pattern:$0x75316420]
    %v2729 = vmul.f32 %v2630, %v2721
    %v2730 = vmul.f32 %v2631, %v2722
    %v2731 = vmul.f32 %v2632, %v2723
    %v2732 = vmul.f32 %v2633, %v2724
    %v2733 = vld [vmem:[#allocation11] sm:$0xff]
    %v2734 = vld [vmem:[#allocation11 + $0x8] sm:$0xff]
    %v2735 = vld [vmem:[#allocation11 + $0x10] sm:$0xff]
    %v2736 = vld [vmem:[#allocation11 + $0x18] sm:$0xff]
    %v2737 = vld [vmem:[%s8] sm:$0x1]
    %v2739 = vperm.slane %v2737, 0
    %v2742 = vsel %vm241, %v2729, 0
    %v2745 = vsel %vm241, %v2730, 0
    %v2748 = vsel %vm241, %v2731, 0
    %v2751 = vsel %vm241, %v2732, 0
    %2753 = vmatpush.msra.mxu0 0.0
    %2754 = vmatpush.msra.mxu0 0.0
    %2755 = vmatpush.msra.mxu0 0.0
    %2756 = vmatpush.msra.mxu0 0.0
    %2757 = vmatpush.msra.mxu0 0.0
    %2758 = vmatpush.msra.mxu0 0.0
    %2759 = vmatpush.msra.mxu0 0.0
    %2760 = vmatpush.msra.mxu0 0.0
    %2761 = vmatpush.msra.mxu0 0.0
    %2762 = vmatpush.msra.mxu0 0.0
    %2763 = vmatpush.msra.mxu0 0.0
    %2764 = vmatpush.msra.mxu0 0.0
    %2765 = vmatpush.msra.mxu0 %v2736
    %2766 = vmatpush.msra.mxu0 %v2735
    %2767 = vmatpush.msra.mxu0 %v2734
    %2768 = vmatpush.msra.mxu0 %v2733
    %2769 = vmatmul.f32.gmra.mxu0 %v2742
    %v2770 = vpop.f32.mrf.mxu0
    %v2771 = vadd.f32 %v2739, %v2770
    %2772 = vmatmul.f32.gmra.mxu0 %v2745
    %v2773 = vpop.f32.mrf.mxu0
    %v2774 = vadd.f32 %v2739, %v2773
    %2775 = vmatmul.f32.gmra.mxu0 %v2748
    %v2776 = vpop.f32.mrf.mxu0
    %v2777 = vadd.f32 %v2739, %v2776
    %2778 = vmatmul.f32.gmra.mxu0 %v2751
    %v2779 = vpop.f32.mrf.mxu0
    %v2780 = vadd.f32 %v2739, %v2779
    %2781 = vdwg.mxu0
    %v2782 = vmax.f32 %v2771, 0.0
    %v2783 = vmax.f32 %v2774, 0.0
    %v2784 = vmax.f32 %v2777, 0.0
    %v2785 = vmax.f32 %v2780, 0.0
    %v2786 = vld [vmem:[#allocation13] sm:$0xff]
    %v2787 = vld [vmem:[#allocation13 + $0x8] sm:$0xff]
    %v2788 = vld [vmem:[#allocation13 + $0x10] sm:$0xff]
    %v2789 = vld [vmem:[#allocation13 + $0x18] sm:$0xff]
    %v2790 = vld [vmem:[#allocation13 + $0x20] sm:$0xff]
    %v2791 = vld [vmem:[#allocation13 + $0x28] sm:$0xff]
    %v2792 = vld [vmem:[#allocation13 + $0x30] sm:$0xff]
    %v2793 = vld [vmem:[#allocation13 + $0x38] sm:$0xff]
    %v2794 = vld [vmem:[%s10] sm:$0x1]
    %v2796 = vperm.slane %v2794, 0
    %vm2798 = vcmask 523264
    %v2800 = vsel %vm2798, %v2782, 0
    %v2803 = vsel %vm2798, %v2783, 0
    %v2806 = vsel %vm2798, %v2784, 0
    %v2809 = vsel %vm2798, %v2785, 0
    %2811 = vmatpush.msra.mxu0 0.0
    %2812 = vmatpush.msra.mxu0 0.0
    %2813 = vmatpush.msra.mxu0 0.0
    %2814 = vmatpush.msra.mxu0 0.0
    %2815 = vmatpush.msra.mxu0 0.0
    %2816 = vmatpush.msra.mxu0 0.0
    %2817 = vmatpush.msra.mxu0 0.0
    %2818 = vmatpush.msra.mxu0 0.0
    %2819 = vmatpush.msra.mxu0 %v2793
    %2820 = vmatpush.msra.mxu0 %v2792
    %2821 = vmatpush.msra.mxu0 %v2791
    %2822 = vmatpush.msra.mxu0 %v2790
    %2823 = vmatpush.msra.mxu0 %v2789
    %2824 = vmatpush.msra.mxu0 %v2788
    %2825 = vmatpush.msra.mxu0 %v2787
    %2826 = vmatpush.msra.mxu0 %v2786
    %2827 = vmatmul.f32.gmra.mxu0 %v2800
    %v2828 = vpop.f32.mrf.mxu0
    %v2829 = vadd.f32 %v2796, %v2828
    %2830 = vmatmul.f32.gmra.mxu0 %v2803
    %v2831 = vpop.f32.mrf.mxu0
    %v2832 = vadd.f32 %v2796, %v2831
    %2833 = vmatmul.f32.gmra.mxu0 %v2806
    %v2834 = vpop.f32.mrf.mxu0
    %v2835 = vadd.f32 %v2796, %v2834
    %2836 = vmatmul.f32.gmra.mxu0 %v2809
    %v2837 = vpop.f32.mrf.mxu0
    %v2838 = vadd.f32 %v2796, %v2837
    %2839 = vdwg.mxu0
    %v2840 = vlaneseq
    %v2841 = vand.u32 %v2840, 127
    %vm2842 = vcmp.ge.s32.totalorder %v2841, 32
    %v2843 = vmax.f32 %v2829, -10.0
    %v2844 = vmax.f32 %v2832, -10.0
    %v2845 = vmax.f32 %v2835, -10.0
    %v2846 = vmax.f32 %v2838, -10.0
    %v2847 = vmin.f32 %v2843, 0.0
    %v2848 = vmin.f32 %v2844, 0.0
    %v2849 = vmin.f32 %v2845, 0.0
    %v2850 = vmin.f32 %v2846, 0.0
    %v2851 = vsel %vm2842, 1, 0
    %vm2852 = vcmp.eq.s32.totalorder %v2851, 1
    %v2853 = vsel %vm2852, %v2847, %v2829
    %v2854 = vsel %vm2852, %v2848, %v2832
    %v2855 = vsel %vm2852, %v2849, %v2835
    %v2856 = vsel %vm2852, %v2850, %v2838
    %2857 = vst.msk [vmem:[#allocation14] sm:$0xff] %vm2798, %v2853
    %2858 = vst.msk [vmem:[#allocation14 + $0x8] sm:$0xff] %vm2798, %v2854
    %2859 = vst.msk [vmem:[#allocation14 + $0x10] sm:$0xff] %vm2798, %v2855
    %2860 = vst.msk [vmem:[#allocation14 + $0x18] sm:$0xff] %vm2798, %v2856
    // Predicated region
    $region74: #{tpu_custom_call.1} parent=1 // pred_check
      _
    $region75: #{tpu_custom_call.1} parent=1 // pred_check_branch
      %2862 = sbr.rel (0) target = $region77
    $region76: #{tpu_custom_call.1} parent=1 // pred_region
      %2864 = vsyncadd [#allocation4], 0
      %s2865 = sshll.u32 [#allocation14], 4
      %s2866 = int_to_ptr.vmem [resolvable:$true] %s2865
      %s2867 = sshll.u32 %s11, 4
      %s2868 = int_to_ptr.hbm [resolvable:$true] %s2867
      %2873 = dma.vmem_to_hbm [thread:$0]  %s2866, 512, %s2868, [#allocation4], 128, 128, 8
    $region77: #{tpu_custom_call.1} parent=1 // pred_fallthru
      _
    // Predicated region
    $region78: #{tpu_custom_call.1} parent=1 // pred_check
      _
    $region79: #{tpu_custom_call.1} parent=1 // pred_check_branch
      %2875 = sbr.rel (0) target = $region81
    $region80: #{tpu_custom_call.1} parent=1 // pred_region
      %2877 = dma.done [#allocation4], 512
    $region81: #{tpu_custom_call.1} parent=1 // pred_fallthru
      _
    %2878 = vsyncpa [#allocation3], 1
    %2879 = vsyncpa [#allocation6], 1
    %2880 = vsyncpa [#allocation9], 1
    %2881 = vsyncpa [#allocation12], 1
    %2882 = vsyncpa [#allocation4], 1

</llo_original>
